<compile_context>
chip_gen: v7x
topology: tpu7x:2x2x1
jax: 0.10.0
libtpu: 0.0.40
codegen_flags: <defaults>
</compile_context>

<pallas_src>
import functools

import jax
import jax.numpy as jnp
from jax.experimental import pallas as pl
from jax.experimental.pallas import tpu as pltpu


# ---------------------------------------------------------------------------
# Tile selection
# ---------------------------------------------------------------------------

_SEMANTICS = ("parallel", "parallel", "arbitrary")


def _pick(dim, prefs):
    for p in prefs:
        if dim % p == 0:
            return p
    return dim


def _pick_tiles(M, K, N):
    tm = _pick(M, (512, 256, 128))
    tk = _pick(K, (1024, 512, 256, 128))
    # Prefer 256-wide output tiles (matches v6e/v7x 256-wide MXU) but keep
    # >=2 blocks on N when possible so v7x megacore has a parallel axis.
    if N % 256 == 0 and N // 256 >= 2:
        tn = 256
    elif N % 128 == 0:
        tn = 128
    else:
        tn = N
    return tm, tk, tn


# ---------------------------------------------------------------------------
# Pallas kernels
# ---------------------------------------------------------------------------

def _conv1x1_fused_kernel(x_ref, w_ref, ps_ref, pt_ref, qs_ref, qt_ref, o_ref):
    """relu(bn2( relu(bn1(x)) @ w )) with f32 accumulation into o_ref."""
    k = pl.program_id(2)

    @pl.when(k == 0)
    def _():
        o_ref[...] = jnp.zeros_like(o_ref)

    # bn1 + relu prologue (per input channel), cast to bf16 for the MXU.
    a = x_ref[...] * ps_ref[...] + pt_ref[...]
    a = jnp.maximum(a, 0.0).astype(jnp.bfloat16)
    o_ref[...] += jnp.dot(a, w_ref[...], preferred_element_type=jnp.float32)

    @pl.when(k == pl.num_programs(2) - 1)
    def _():
        # bn2 + relu epilogue (per output channel).
        y = o_ref[...] * qs_ref[...] + qt_ref[...]
        o_ref[...] = jnp.maximum(y, 0.0)


def _matmul_bias_bn_kernel(a_ref, b_ref, bias_ref, s_ref, t_ref, o_ref):
    """(patches @ w + bias) * scale + shift  (downsample conv + folded BN)."""
    k = pl.program_id(2)

    @pl.when(k == 0)
    def _():
        o_ref[...] = jnp.zeros_like(o_ref)

    o_ref[...] += jnp.dot(a_ref[...], b_ref[...],
                          preferred_element_type=jnp.float32)

    @pl.when(k == pl.num_programs(2) - 1)
    def _():
        o_ref[...] = (o_ref[...] + bias_ref[...]) * s_ref[...] + t_ref[...]


def _matmul_residual_kernel(a_ref, b_ref, r_ref, o_ref, *, a_coef, b_coef):
    """a_coef*residual + b_coef*(patches @ w)  (conv2 + residual combine)."""
    k = pl.program_id(2)

    @pl.when(k == 0)
    def _():
        o_ref[...] = jnp.zeros_like(o_ref)

    o_ref[...] += jnp.dot(a_ref[...], b_ref[...],
                          preferred_element_type=jnp.float32)

    @pl.when(k == pl.num_programs(2) - 1)
    def _():
        o_ref[...] = a_coef * r_ref[...] + b_coef * o_ref[...]


# ---------------------------------------------------------------------------
# pallas_call wrappers
# ---------------------------------------------------------------------------

def conv1x1_bn_relu_fused(x2d, w, pre_scale, pre_shift, post_scale, post_shift):
    M, K = x2d.shape
    _, N = w.shape
    tm, tk, tn = _pick_tiles(M, K, N)
    grid = (M // tm, N // tn, K // tk)
    return pl.pallas_call(
        _conv1x1_fused_kernel,
        out_shape=jax.ShapeDtypeStruct((M, N), jnp.float32),
        grid_spec=pltpu.PrefetchScalarGridSpec(
            num_scalar_prefetch=0,
            grid=grid,
            in_specs=[
                pl.BlockSpec((tm, tk), lambda i, j, k: (i, k)),
                pl.BlockSpec((tk, tn), lambda i, j, k: (k, j)),
                pl.BlockSpec((1, tk), lambda i, j, k: (0, k)),
                pl.BlockSpec((1, tk), lambda i, j, k: (0, k)),
                pl.BlockSpec((1, tn), lambda i, j, k: (0, j)),
                pl.BlockSpec((1, tn), lambda i, j, k: (0, j)),
            ],
            out_specs=pl.BlockSpec((tm, tn), lambda i, j, k: (i, j)),
        ),
        compiler_params=pltpu.CompilerParams(dimension_semantics=_SEMANTICS),
    )(x2d, w,
      pre_scale.reshape(1, K).astype(jnp.float32),
      pre_shift.reshape(1, K).astype(jnp.float32),
      post_scale.reshape(1, N).astype(jnp.float32),
      post_shift.reshape(1, N).astype(jnp.float32))


def matmul_bias_bn(a2d, w, bias, scale, shift):
    M, K = a2d.shape
    _, N = w.shape
    tm, tk, tn = _pick_tiles(M, K, N)
    grid = (M // tm, N // tn, K // tk)
    return pl.pallas_call(
        _matmul_bias_bn_kernel,
        out_shape=jax.ShapeDtypeStruct((M, N), jnp.float32),
        grid_spec=pltpu.PrefetchScalarGridSpec(
            num_scalar_prefetch=0,
            grid=grid,
            in_specs=[
                pl.BlockSpec((tm, tk), lambda i, j, k: (i, k)),
                pl.BlockSpec((tk, tn), lambda i, j, k: (k, j)),
                pl.BlockSpec((1, tn), lambda i, j, k: (0, j)),
                pl.BlockSpec((1, tn), lambda i, j, k: (0, j)),
                pl.BlockSpec((1, tn), lambda i, j, k: (0, j)),
            ],
            out_specs=pl.BlockSpec((tm, tn), lambda i, j, k: (i, j)),
        ),
        compiler_params=pltpu.CompilerParams(dimension_semantics=_SEMANTICS),
    )(a2d, w,
      bias.reshape(1, N).astype(jnp.float32),
      scale.reshape(1, N).astype(jnp.float32),
      shift.reshape(1, N).astype(jnp.float32))


def matmul_residual(a2d, w, res2d, a_coef, b_coef):
    M, K = a2d.shape
    _, N = w.shape
    tm, tk, tn = _pick_tiles(M, K, N)
    grid = (M // tm, N // tn, K // tk)
    kernel = functools.partial(_matmul_residual_kernel,
                               a_coef=a_coef, b_coef=b_coef)
    return pl.pallas_call(
        kernel,
        out_shape=jax.ShapeDtypeStruct((M, N), jnp.float32),
        grid_spec=pltpu.PrefetchScalarGridSpec(
            num_scalar_prefetch=0,
            grid=grid,
            in_specs=[
                pl.BlockSpec((tm, tk), lambda i, j, k: (i, k)),
                pl.BlockSpec((tk, tn), lambda i, j, k: (k, j)),
                pl.BlockSpec((tm, tn), lambda i, j, k: (i, j)),
            ],
            out_specs=pl.BlockSpec((tm, tn), lambda i, j, k: (i, j)),
        ),
        compiler_params=pltpu.CompilerParams(dimension_semantics=_SEMANTICS),
    )(a2d, w, res2d.astype(jnp.float32))


# ---------------------------------------------------------------------------
# Plain-JAX glue (layout plumbing only)
# ---------------------------------------------------------------------------

def fold_bn(bn, eps=1e-5):
    gamma, beta, mean, var = bn
    scale = gamma / jnp.sqrt(var + eps)
    shift = beta - mean * scale
    return scale, shift


def im2col(x, kh, kw, stride, padding):
    """NHWC (bf16) -> (N*Ho*Wo, kh*kw*C) patches, ordered (kh, kw, cin)."""
    N, H, W, C = x.shape
    if padding:
        x = jnp.pad(x, ((0, 0), (padding, padding), (padding, padding), (0, 0)))
    Ho = (H + 2 * padding - kh) // stride + 1
    Wo = (W + 2 * padding - kw) // stride + 1
    cols = []
    for i in range(kh):
        for j in range(kw):
            cols.append(x[:, i:i + stride * Ho:stride, j:j + stride * Wo:stride, :])
    patches = jnp.concatenate(cols, axis=-1)
    return patches.reshape(N * Ho * Wo, kh * kw * C), Ho, Wo


def residual_block_2dconv(x_nchw, params, *, kernelsize, stride, padding,
                          a=1.0, b=1.0, downsample=True):
    x = jnp.transpose(x_nchw, (0, 2, 3, 1)).astype(jnp.float32)  # NCHW -> NHWC
    N, H, W, Cin = x.shape
    Cout = params["conv2_w"].shape[0]
    x_bf = x.astype(jnp.bfloat16)

    s1, t1 = fold_bn(params["bn1"])
    s2, t2 = fold_bn(params["bn2"])

    # Main path stage 1: bn1 -> relu -> conv1(1x1, no bias) -> [dropout]
    #                    -> bn2 -> relu   (all fused in one kernel)
    w1 = jnp.transpose(params["conv1_w"], (2, 3, 1, 0)).reshape(Cin, Cin)
    y1_2d = conv1x1_bn_relu_fused(x_bf.reshape(N * H * W, Cin),
                                  w1.astype(jnp.bfloat16), s1, t1, s2, t2)

    # Residual path: downsample = conv(k, stride, padding, bias) -> bn, fused.
    if downsample:
        sd, td = fold_bn(params["ds_bn"])
        pd, _, _ = im2col(x_bf, kernelsize, kernelsize, stride, padding)
        wd = jnp.transpose(params["ds_conv_w"], (2, 3, 1, 0)).reshape(-1, Cout)
        res2d = matmul_bias_bn(pd, wd.astype(jnp.bfloat16),
                               params["ds_conv_b"], sd, td)
    else:
        assert Cin == Cout and stride == 1
        res2d = x.reshape(N * H * W, Cin)

    # Main path stage 2: conv2(k, stride, padding, no bias) -> [dropout],
    # fused with the residual combine out = a*residual + b*out.
    y1 = y1_2d.reshape(N, H, W, Cin).astype(jnp.bfloat16)
    p2, Ho, Wo = im2col(y1, kernelsize, kernelsize, stride, padding)
    w2 = jnp.transpose(params["conv2_w"], (2, 3, 1, 0)).reshape(-1, Cout)
    out2d = matmul_residual(p2, w2.astype(jnp.bfloat16), res2d,
                            float(a), float(b))
    out = out2d.reshape(N, Ho, Wo, Cout)
    return jnp.transpose(out, (0, 3, 1, 2))  # NHWC -> NCHW


# ---------------------------------------------------------------------------
# Plain-JAX reference (f32) for validation
# ---------------------------------------------------------------------------

def reference_forward(x, params, *, kernelsize, stride, padding, a, b):
    eps = 1e-5

    def bn(y, p):
        g, be, m, v = p
        return ((y - m[None, :, None, None]) /
                jnp.sqrt(v[None, :, None, None] + eps) *
                g[None, :, None, None] + be[None, :, None, None])

    def conv(y, w, bias, s, p):
        z = jax.lax.conv_general_dilated(
            y, w, window_strides=(s, s), padding=[(p, p), (p, p)],
            dimension_numbers=("NCHW", "OIHW", "NCHW"))
        if bias is not None:
            z = z + bias[None, :, None, None]
        return z

    out = jnp.maximum(bn(x, params["bn1"]), 0.0)
    out = conv(out, params["conv1_w"], None, 1, 0)
    out = jnp.maximum(bn(out, params["bn2"]), 0.0)
    out = conv(out, params["conv2_w"], None, stride, padding)
    res = conv(x, params["ds_conv_w"], params["ds_conv_b"], stride, padding)
    res = bn(res, params["ds_bn"])
    return a * res + b * out


# ---------------------------------------------------------------------------
# Deterministic parameter initialization (shapes from the PyTorch __init__)
# ---------------------------------------------------------------------------

def init_params(key, cin, cout, kernelsize):
    def conv_w(k, co, ci, kh, kw):
        fan_in = ci * kh * kw
        return jax.random.normal(k, (co, ci, kh, kw), jnp.float32) / jnp.sqrt(fan_in)

    def bn_p(k, c):
        k1, k2, k3, k4 = jax.random.split(k, 4)
        return (1.0 + 0.1 * jax.random.normal(k1, (c,), jnp.float32),
                0.1 * jax.random.normal(k2, (c,), jnp.float32),
                0.1 * jax.random.normal(k3, (c,), jnp.float32),
                1.0 + 0.1 * jax.random.uniform(k4, (c,), jnp.float32))

    ks = jax.random.split(key, 7)
    return {
        "bn1": bn_p(ks[0], cin),
        "conv1_w": conv_w(ks[1], cin, cin, 1, 1),
        "bn2": bn_p(ks[2], cin),
        "conv2_w": conv_w(ks[3], cout, cin, kernelsize, kernelsize),
        "ds_conv_w": conv_w(ks[4], cout, cin, kernelsize, kernelsize),
        "ds_conv_b": 0.01 * jax.random.normal(ks[5], (cout,), jnp.float32),
        "ds_bn": bn_p(ks[6], cout),
    }


# ---------------------------------------------------------------------------

if __name__ == "__main__":
    key = jax.random.PRNGKey(0)
    a_coef, b_coef = 2.0, 0.3

    configs = [
        # small shapes from the module spec
        dict(batch=2, cin=4, cout=8, hw=16, ks=4, stride=2, pad=1),
        # larger channels/spatial to exercise real tiling (tm=512, tk=1024, tn=128/256)
        dict(batch=2, cin=128, cout=256, hw=32, ks=4, stride=2, pad=1),
    ]

    for cfg in configs:
        kx, kp, key = jax.random.split(key, 3)
        x = jax.random.normal(
            kx, (cfg["batch"], cfg["cin"], cfg["hw"], cfg["hw"]), jnp.float32)
        params = init_params(kp, cfg["cin"], cfg["cout"], cfg["ks"])

        fwd = jax.jit(functools.partial(
            residual_block_2dconv, kernelsize=cfg["ks"], stride=cfg["stride"],
            padding=cfg["pad"], a=a_coef, b=b_coef, downsample=True))
        out = jax.block_until_ready(fwd(x, params))

        ref = reference_forward(x, params, kernelsize=cfg["ks"],
                                stride=cfg["stride"], padding=cfg["pad"],
                                a=a_coef, b=b_coef)

        ho = (cfg["hw"] + 2 * cfg["pad"] - cfg["ks"]) // cfg["stride"] + 1
        assert out.shape == (cfg["batch"], cfg["cout"], ho, ho), out.shape
        assert bool(jnp.all(jnp.isfinite(out)))
        max_err = float(jnp.max(jnp.abs(out - ref)))
        assert bool(jnp.allclose(out, ref, rtol=5e-2, atol=5e-2)), max_err

    print("KERNEL_OK")
</pallas_src>

<mosaic_0001>
module attributes {stable_mosaic.version = 11 : i64} {
  func.func @_conv1x1_fused_kernel(%arg0: i32, %arg1: i32, %arg2: i32, %arg3: memref<512x4xbf16, #tpu.memory_space<vmem>>, %arg4: memref<4x4xbf16, #tpu.memory_space<vmem>>, %arg5: memref<1x4xf32, #tpu.memory_space<vmem>>, %arg6: memref<1x4xf32, #tpu.memory_space<vmem>>, %arg7: memref<1x4xf32, #tpu.memory_space<vmem>>, %arg8: memref<1x4xf32, #tpu.memory_space<vmem>>, %arg9: memref<512x4xf32, #tpu.memory_space<vmem>>) attributes {dimension_semantics = [#tpu.dimension_semantics<parallel>, #tpu.dimension_semantics<parallel>, #tpu.dimension_semantics<arbitrary>], iteration_bounds = array<i64: 1, 1, 1>, scalar_prefetch = 0 : i64, scratch_operands = 0 : i64, tpu.core_type = #tpu.core_type<tc>, window_params = [{transform_indices = @transform_0, window_bounds = array<i64: 512, 4>}, {transform_indices = @transform_1, window_bounds = array<i64: 4, 4>}, {transform_indices = @transform_2, window_bounds = array<i64: 1, 4>}, {transform_indices = @transform_3, window_bounds = array<i64: 1, 4>}, {transform_indices = @transform_4, window_bounds = array<i64: 1, 4>}, {transform_indices = @transform_5, window_bounds = array<i64: 1, 4>}, {transform_indices = @transform_6, window_bounds = array<i64: 512, 4>}]} {
    %c0_i32 = arith.constant 0 : i32
    %0 = arith.cmpi eq, %arg2, %c0_i32 : i32
    %1 = arith.extui %0 : i1 to i32
    %c0_i32_0 = arith.constant 0 : i32
    %2 = arith.cmpi ne, %1, %c0_i32_0 : i32
    scf.if %2 {
      %cst_15 = arith.constant 0.000000e+00 : f32
      %22 = vector.broadcast %cst_15 : f32 to vector<512x4xf32>
      %c0_16 = arith.constant 0 : index
      %c0_17 = arith.constant 0 : index
      %23 = vector.load %arg9[%c0_16, %c0_17] : memref<512x4xf32, #tpu.memory_space<vmem>>, vector<512x4xf32>
      tpu.vector_store %arg9[%c0_16, %c0_17], %22 {strides = array<i32>} : memref<512x4xf32, #tpu.memory_space<vmem>>, vector<512x4xf32>,
    } else {
    }
    %c0 = arith.constant 0 : index
    %c0_1 = arith.constant 0 : index
    %3 = vector.load %arg3[%c0, %c0_1] : memref<512x4xbf16, #tpu.memory_space<vmem>>, vector<512x4xbf16>
    %c0_2 = arith.constant 0 : index
    %c0_3 = arith.constant 0 : index
    %4 = vector.load %arg5[%c0_2, %c0_3] : memref<1x4xf32, #tpu.memory_space<vmem>>, vector<1x4xf32>
    %5 = arith.extf %3 : vector<512x4xbf16> to vector<512x4xf32>
    %6 = vector.broadcast %4 : vector<1x4xf32> to vector<512x4xf32>
    %7 = arith.mulf %5, %6 : vector<512x4xf32>
    %c0_4 = arith.constant 0 : index
    %c0_5 = arith.constant 0 : index
    %8 = vector.load %arg6[%c0_4, %c0_5] : memref<1x4xf32, #tpu.memory_space<vmem>>, vector<1x4xf32>
    %9 = vector.broadcast %8 : vector<1x4xf32> to vector<512x4xf32>
    %10 = arith.addf %7, %9 : vector<512x4xf32>
    %cst = arith.constant 0.000000e+00 : f32
    %11 = vector.broadcast %cst : f32 to vector<512x4xf32>
    %12 = arith.maximumf %10, %11 : vector<512x4xf32>
    %13 = arith.truncf %12 : vector<512x4xf32> to vector<512x4xbf16>
    %c0_6 = arith.constant 0 : index
    %c0_7 = arith.constant 0 : index
    %14 = vector.load %arg9[%c0_6, %c0_7] : memref<512x4xf32, #tpu.memory_space<vmem>>, vector<512x4xf32>
    %c0_8 = arith.constant 0 : index
    %c0_9 = arith.constant 0 : index
    %15 = vector.load %arg4[%c0_8, %c0_9] : memref<4x4xbf16, #tpu.memory_space<vmem>>, vector<4x4xbf16>
    %cst_10 = arith.constant dense<0.000000e+00> : vector<512x4xf32>
    %16 = tpu.matmul %13, %15, %cst_10 {dimension_numbers = #tpu.dot_dimension_numbers<[1], [0], [0], [1], [0, 0, 1, 1], [], []>} : vector<512x4xbf16>, vector<4x4xbf16>, vector<512x4xf32> -> vector<512x4xf32>
    %17 = arith.addf %14, %16 : vector<512x4xf32>
    %c0_11 = arith.constant 0 : index
    %c0_12 = arith.constant 0 : index
    %18 = vector.load %arg9[%c0_11, %c0_12] : memref<512x4xf32, #tpu.memory_space<vmem>>, vector<512x4xf32>
    tpu.vector_store %arg9[%c0_11, %c0_12], %17 {strides = array<i32>} : memref<512x4xf32, #tpu.memory_space<vmem>>, vector<512x4xf32>,
    %c0_i32_13 = arith.constant 0 : i32
    %19 = arith.cmpi eq, %arg2, %c0_i32_13 : i32
    %20 = arith.extui %19 : i1 to i32
    %c0_i32_14 = arith.constant 0 : i32
    %21 = arith.cmpi ne, %20, %c0_i32_14 : i32
    scf.if %21 {
      %c0_15 = arith.constant 0 : index
      %c0_16 = arith.constant 0 : index
      %22 = vector.load %arg9[%c0_15, %c0_16] : memref<512x4xf32, #tpu.memory_space<vmem>>, vector<512x4xf32>
      %c0_17 = arith.constant 0 : index
      %c0_18 = arith.constant 0 : index
      %23 = vector.load %arg7[%c0_17, %c0_18] : memref<1x4xf32, #tpu.memory_space<vmem>>, vector<1x4xf32>
      %24 = vector.broadcast %23 : vector<1x4xf32> to vector<512x4xf32>
      %25 = arith.mulf %22, %24 : vector<512x4xf32>
      %c0_19 = arith.constant 0 : index
      %c0_20 = arith.constant 0 : index
      %26 = vector.load %arg8[%c0_19, %c0_20] : memref<1x4xf32, #tpu.memory_space<vmem>>, vector<1x4xf32>
      %27 = vector.broadcast %26 : vector<1x4xf32> to vector<512x4xf32>
      %28 = arith.addf %25, %27 : vector<512x4xf32>
      %cst_21 = arith.constant 0.000000e+00 : f32
      %29 = vector.broadcast %cst_21 : f32 to vector<512x4xf32>
      %30 = arith.maximumf %28, %29 : vector<512x4xf32>
      %c0_22 = arith.constant 0 : index
      %c0_23 = arith.constant 0 : index
      %31 = vector.load %arg9[%c0_22, %c0_23] : memref<512x4xf32, #tpu.memory_space<vmem>>, vector<512x4xf32>
      tpu.vector_store %arg9[%c0_22, %c0_23], %30 {strides = array<i32>} : memref<512x4xf32, #tpu.memory_space<vmem>>, vector<512x4xf32>,
    } else {
    }
    return
  }
  func.func @transform_0(%arg0: i32, %arg1: i32, %arg2: i32) -> (i32, i32) {
    %c0_i32 = arith.constant 0 : i32
    return %arg0, %arg2 : i32, i32
  }
  func.func @transform_1(%arg0: i32, %arg1: i32, %arg2: i32) -> (i32, i32) {
    %c0_i32 = arith.constant 0 : i32
    return %arg2, %arg1 : i32, i32
  }
  func.func @transform_2(%arg0: i32, %arg1: i32, %arg2: i32) -> (i32, i32) {
    %c0_i32 = arith.constant 0 : i32
    %c0_i32_0 = arith.constant 0 : i32
    return %c0_i32, %arg2 : i32, i32
  }
  func.func @transform_3(%arg0: i32, %arg1: i32, %arg2: i32) -> (i32, i32) {
    %c0_i32 = arith.constant 0 : i32
    %c0_i32_0 = arith.constant 0 : i32
    return %c0_i32, %arg2 : i32, i32
  }
  func.func @transform_4(%arg0: i32, %arg1: i32, %arg2: i32) -> (i32, i32) {
    %c0_i32 = arith.constant 0 : i32
    %c0_i32_0 = arith.constant 0 : i32
    return %c0_i32, %arg1 : i32, i32
  }
  func.func @transform_5(%arg0: i32, %arg1: i32, %arg2: i32) -> (i32, i32) {
    %c0_i32 = arith.constant 0 : i32
    %c0_i32_0 = arith.constant 0 : i32
    return %c0_i32, %arg1 : i32, i32
  }
  func.func @transform_6(%arg0: i32, %arg1: i32, %arg2: i32) -> (i32, i32) {
    %c0_i32 = arith.constant 0 : i32
    return %arg0, %arg1 : i32, i32
  }
}

module attributes {stable_mosaic.version = 11 : i64} {
  func.func @_matmul_bias_bn_kernel(%arg0: i32, %arg1: i32, %arg2: i32, %arg3: memref<128x64xbf16, #tpu.memory_space<vmem>>, %arg4: memref<64x8xbf16, #tpu.memory_space<vmem>>, %arg5: memref<1x8xf32, #tpu.memory_space<vmem>>, %arg6: memref<1x8xf32, #tpu.memory_space<vmem>>, %arg7: memref<1x8xf32, #tpu.memory_space<vmem>>, %arg8: memref<128x8xf32, #tpu.memory_space<vmem>>) attributes {dimension_semantics = [#tpu.dimension_semantics<parallel>, #tpu.dimension_semantics<parallel>, #tpu.dimension_semantics<arbitrary>], iteration_bounds = array<i64: 1, 1, 1>, scalar_prefetch = 0 : i64, scratch_operands = 0 : i64, tpu.core_type = #tpu.core_type<tc>, window_params = [{transform_indices = @transform_0, window_bounds = array<i64: 128, 64>}, {transform_indices = @transform_1, window_bounds = array<i64: 64, 8>}, {transform_indices = @transform_2, window_bounds = array<i64: 1, 8>}, {transform_indices = @transform_3, window_bounds = array<i64: 1, 8>}, {transform_indices = @transform_4, window_bounds = array<i64: 1, 8>}, {transform_indices = @transform_5, window_bounds = array<i64: 128, 8>}]} {
    %c0_i32 = arith.constant 0 : i32
    %0 = arith.cmpi eq, %arg2, %c0_i32 : i32
    %1 = arith.extui %0 : i1 to i32
    %c0_i32_0 = arith.constant 0 : i32
    %2 = arith.cmpi ne, %1, %c0_i32_0 : i32
    scf.if %2 {
      %cst_10 = arith.constant 0.000000e+00 : f32
      %12 = vector.broadcast %cst_10 : f32 to vector<128x8xf32>
      %c0_11 = arith.constant 0 : index
      %c0_12 = arith.constant 0 : index
      %13 = vector.load %arg8[%c0_11, %c0_12] : memref<128x8xf32, #tpu.memory_space<vmem>>, vector<128x8xf32>
      tpu.vector_store %arg8[%c0_11, %c0_12], %12 {strides = array<i32>} : memref<128x8xf32, #tpu.memory_space<vmem>>, vector<128x8xf32>,
    } else {
    }
    %c0 = arith.constant 0 : index
    %c0_1 = arith.constant 0 : index
    %3 = vector.load %arg8[%c0, %c0_1] : memref<128x8xf32, #tpu.memory_space<vmem>>, vector<128x8xf32>
    %c0_2 = arith.constant 0 : index
    %c0_3 = arith.constant 0 : index
    %4 = vector.load %arg3[%c0_2, %c0_3] : memref<128x64xbf16, #tpu.memory_space<vmem>>, vector<128x64xbf16>
    %c0_4 = arith.constant 0 : index
    %c0_5 = arith.constant 0 : index
    %5 = vector.load %arg4[%c0_4, %c0_5] : memref<64x8xbf16, #tpu.memory_space<vmem>>, vector<64x8xbf16>
    %cst = arith.constant dense<0.000000e+00> : vector<128x8xf32>
    %6 = tpu.matmul %4, %5, %cst {dimension_numbers = #tpu.dot_dimension_numbers<[1], [0], [0], [1], [0, 0, 1, 1], [], []>} : vector<128x64xbf16>, vector<64x8xbf16>, vector<128x8xf32> -> vector<128x8xf32>
    %7 = arith.addf %3, %6 : vector<128x8xf32>
    %c0_6 = arith.constant 0 : index
    %c0_7 = arith.constant 0 : index
    %8 = vector.load %arg8[%c0_6, %c0_7] : memref<128x8xf32, #tpu.memory_space<vmem>>, vector<128x8xf32>
    tpu.vector_store %arg8[%c0_6, %c0_7], %7 {strides = array<i32>} : memref<128x8xf32, #tpu.memory_space<vmem>>, vector<128x8xf32>,
    %c0_i32_8 = arith.constant 0 : i32
    %9 = arith.cmpi eq, %arg2, %c0_i32_8 : i32
    %10 = arith.extui %9 : i1 to i32
    %c0_i32_9 = arith.constant 0 : i32
    %11 = arith.cmpi ne, %10, %c0_i32_9 : i32
    scf.if %11 {
      %c0_10 = arith.constant 0 : index
      %c0_11 = arith.constant 0 : index
      %12 = vector.load %arg8[%c0_10, %c0_11] : memref<128x8xf32, #tpu.memory_space<vmem>>, vector<128x8xf32>
      %c0_12 = arith.constant 0 : index
      %c0_13 = arith.constant 0 : index
      %13 = vector.load %arg5[%c0_12, %c0_13] : memref<1x8xf32, #tpu.memory_space<vmem>>, vector<1x8xf32>
      %14 = vector.broadcast %13 : vector<1x8xf32> to vector<128x8xf32>
      %15 = arith.addf %12, %14 : vector<128x8xf32>
      %c0_14 = arith.constant 0 : index
      %c0_15 = arith.constant 0 : index
      %16 = vector.load %arg6[%c0_14, %c0_15] : memref<1x8xf32, #tpu.memory_space<vmem>>, vector<1x8xf32>
      %17 = vector.broadcast %16 : vector<1x8xf32> to vector<128x8xf32>
      %18 = arith.mulf %15, %17 : vector<128x8xf32>
      %c0_16 = arith.constant 0 : index
      %c0_17 = arith.constant 0 : index
      %19 = vector.load %arg7[%c0_16, %c0_17] : memref<1x8xf32, #tpu.memory_space<vmem>>, vector<1x8xf32>
      %20 = vector.broadcast %19 : vector<1x8xf32> to vector<128x8xf32>
      %21 = arith.addf %18, %20 : vector<128x8xf32>
      %c0_18 = arith.constant 0 : index
      %c0_19 = arith.constant 0 : index
      %22 = vector.load %arg8[%c0_18, %c0_19] : memref<128x8xf32, #tpu.memory_space<vmem>>, vector<128x8xf32>
      tpu.vector_store %arg8[%c0_18, %c0_19], %21 {strides = array<i32>} : memref<128x8xf32, #tpu.memory_space<vmem>>, vector<128x8xf32>,
    } else {
    }
    return
  }
  func.func @transform_0(%arg0: i32, %arg1: i32, %arg2: i32) -> (i32, i32) {
    %c0_i32 = arith.constant 0 : i32
    return %arg0, %arg2 : i32, i32
  }
  func.func @transform_1(%arg0: i32, %arg1: i32, %arg2: i32) -> (i32, i32) {
    %c0_i32 = arith.constant 0 : i32
    return %arg2, %arg1 : i32, i32
  }
  func.func @transform_2(%arg0: i32, %arg1: i32, %arg2: i32) -> (i32, i32) {
    %c0_i32 = arith.constant 0 : i32
    %c0_i32_0 = arith.constant 0 : i32
    return %c0_i32, %arg1 : i32, i32
  }
  func.func @transform_3(%arg0: i32, %arg1: i32, %arg2: i32) -> (i32, i32) {
    %c0_i32 = arith.constant 0 : i32
    %c0_i32_0 = arith.constant 0 : i32
    return %c0_i32, %arg1 : i32, i32
  }
  func.func @transform_4(%arg0: i32, %arg1: i32, %arg2: i32) -> (i32, i32) {
    %c0_i32 = arith.constant 0 : i32
    %c0_i32_0 = arith.constant 0 : i32
    return %c0_i32, %arg1 : i32, i32
  }
  func.func @transform_5(%arg0: i32, %arg1: i32, %arg2: i32) -> (i32, i32) {
    %c0_i32 = arith.constant 0 : i32
    return %arg0, %arg1 : i32, i32
  }
}

module attributes {stable_mosaic.version = 11 : i64} {
  func.func @_matmul_residual_kernel(%arg0: i32, %arg1: i32, %arg2: i32, %arg3: memref<128x64xbf16, #tpu.memory_space<vmem>>, %arg4: memref<64x8xbf16, #tpu.memory_space<vmem>>, %arg5: memref<128x8xf32, #tpu.memory_space<vmem>>, %arg6: memref<128x8xf32, #tpu.memory_space<vmem>>) attributes {dimension_semantics = [#tpu.dimension_semantics<parallel>, #tpu.dimension_semantics<parallel>, #tpu.dimension_semantics<arbitrary>], iteration_bounds = array<i64: 1, 1, 1>, scalar_prefetch = 0 : i64, scratch_operands = 0 : i64, tpu.core_type = #tpu.core_type<tc>, window_params = [{transform_indices = @transform_0, window_bounds = array<i64: 128, 64>}, {transform_indices = @transform_1, window_bounds = array<i64: 64, 8>}, {transform_indices = @transform_2, window_bounds = array<i64: 128, 8>}, {transform_indices = @transform_3, window_bounds = array<i64: 128, 8>}]} {
    %c0_i32 = arith.constant 0 : i32
    %0 = arith.cmpi eq, %arg2, %c0_i32 : i32
    %1 = arith.extui %0 : i1 to i32
    %c0_i32_0 = arith.constant 0 : i32
    %2 = arith.cmpi ne, %1, %c0_i32_0 : i32
    scf.if %2 {
      %cst_10 = arith.constant 0.000000e+00 : f32
      %12 = vector.broadcast %cst_10 : f32 to vector<128x8xf32>
      %c0_11 = arith.constant 0 : index
      %c0_12 = arith.constant 0 : index
      %13 = vector.load %arg6[%c0_11, %c0_12] : memref<128x8xf32, #tpu.memory_space<vmem>>, vector<128x8xf32>
      tpu.vector_store %arg6[%c0_11, %c0_12], %12 {strides = array<i32>} : memref<128x8xf32, #tpu.memory_space<vmem>>, vector<128x8xf32>,
    } else {
    }
    %c0 = arith.constant 0 : index
    %c0_1 = arith.constant 0 : index
    %3 = vector.load %arg6[%c0, %c0_1] : memref<128x8xf32, #tpu.memory_space<vmem>>, vector<128x8xf32>
    %c0_2 = arith.constant 0 : index
    %c0_3 = arith.constant 0 : index
    %4 = vector.load %arg3[%c0_2, %c0_3] : memref<128x64xbf16, #tpu.memory_space<vmem>>, vector<128x64xbf16>
    %c0_4 = arith.constant 0 : index
    %c0_5 = arith.constant 0 : index
    %5 = vector.load %arg4[%c0_4, %c0_5] : memref<64x8xbf16, #tpu.memory_space<vmem>>, vector<64x8xbf16>
    %cst = arith.constant dense<0.000000e+00> : vector<128x8xf32>
    %6 = tpu.matmul %4, %5, %cst {dimension_numbers = #tpu.dot_dimension_numbers<[1], [0], [0], [1], [0, 0, 1, 1], [], []>} : vector<128x64xbf16>, vector<64x8xbf16>, vector<128x8xf32> -> vector<128x8xf32>
    %7 = arith.addf %3, %6 : vector<128x8xf32>
    %c0_6 = arith.constant 0 : index
    %c0_7 = arith.constant 0 : index
    %8 = vector.load %arg6[%c0_6, %c0_7] : memref<128x8xf32, #tpu.memory_space<vmem>>, vector<128x8xf32>
    tpu.vector_store %arg6[%c0_6, %c0_7], %7 {strides = array<i32>} : memref<128x8xf32, #tpu.memory_space<vmem>>, vector<128x8xf32>,
    %c0_i32_8 = arith.constant 0 : i32
    %9 = arith.cmpi eq, %arg2, %c0_i32_8 : i32
    %10 = arith.extui %9 : i1 to i32
    %c0_i32_9 = arith.constant 0 : i32
    %11 = arith.cmpi ne, %10, %c0_i32_9 : i32
    scf.if %11 {
      %c0_10 = arith.constant 0 : index
      %c0_11 = arith.constant 0 : index
      %12 = vector.load %arg5[%c0_10, %c0_11] : memref<128x8xf32, #tpu.memory_space<vmem>>, vector<128x8xf32>
      %cst_12 = arith.constant 2.000000e+00 : f32
      %13 = vector.broadcast %cst_12 : f32 to vector<128x8xf32>
      %14 = arith.mulf %13, %12 : vector<128x8xf32>
      %c0_13 = arith.constant 0 : index
      %c0_14 = arith.constant 0 : index
      %15 = vector.load %arg6[%c0_13, %c0_14] : memref<128x8xf32, #tpu.memory_space<vmem>>, vector<128x8xf32>
      %cst_15 = arith.constant 3.000000e-01 : f32
      %16 = vector.broadcast %cst_15 : f32 to vector<128x8xf32>
      %17 = arith.mulf %16, %15 : vector<128x8xf32>
      %18 = arith.addf %14, %17 : vector<128x8xf32>
      %c0_16 = arith.constant 0 : index
      %c0_17 = arith.constant 0 : index
      %19 = vector.load %arg6[%c0_16, %c0_17] : memref<128x8xf32, #tpu.memory_space<vmem>>, vector<128x8xf32>
      tpu.vector_store %arg6[%c0_16, %c0_17], %18 {strides = array<i32>} : memref<128x8xf32, #tpu.memory_space<vmem>>, vector<128x8xf32>,
    } else {
    }
    return
  }
  func.func @transform_0(%arg0: i32, %arg1: i32, %arg2: i32) -> (i32, i32) {
    %c0_i32 = arith.constant 0 : i32
    return %arg0, %arg2 : i32, i32
  }
  func.func @transform_1(%arg0: i32, %arg1: i32, %arg2: i32) -> (i32, i32) {
    %c0_i32 = arith.constant 0 : i32
    return %arg2, %arg1 : i32, i32
  }
  func.func @transform_2(%arg0: i32, %arg1: i32, %arg2: i32) -> (i32, i32) {
    %c0_i32 = arith.constant 0 : i32
    return %arg0, %arg1 : i32, i32
  }
  func.func @transform_3(%arg0: i32, %arg1: i32, %arg2: i32) -> (i32, i32) {
    %c0_i32 = arith.constant 0 : i32
    return %arg0, %arg1 : i32, i32
  }
}

</mosaic_0001>

<llo_original>
// kernel: residual_block_2dconv.3
$region0: #{residual_block_2dconv.3}
  #allocation0 [shape = 'u32[]', space=smem, size = 0x4, offset = 0x4, fixed_abs, tag = 'smem constant byte address 0x4 - core index']
  #allocation1 [shape = 'u32[144,128]{1,0:T(1,128)}', space=vmem, size = 0x12000, scoped, tag = 'internal scratch']
  %s0 = inlined_call_operand.vmem [shape: bf16[512,4], index: 0, kind: input, shape index: {}]
  %s1 = inlined_call_operand.vmem [shape: bf16[4,4], index: 1, kind: input, shape index: {}]
  %s2 = inlined_call_operand.vmem [shape: f32[1,4], index: 2, kind: input, shape index: {}]
  %s3 = inlined_call_operand.vmem [shape: f32[1,4], index: 3, kind: input, shape index: {}]
  %s4 = inlined_call_operand.vmem [shape: f32[1,4], index: 4, kind: input, shape index: {}]
  %s5 = inlined_call_operand.vmem [shape: f32[1,4], index: 5, kind: input, shape index: {}]
  %s6 = inlined_call_operand.vmem [shape: f32[512,4], index: 6, kind: output, shape index: {}]
  %s7 = sld [smem:[#allocation0]]
  $region42: #{residual_block_2dconv.3} parent=0
    _
  %s9 = ssub.s32 1, %s7
  %s10 = scalar_select 0, %s9, %s7
  // Predicated region
  $region2: #{residual_block_2dconv.3} parent=0 // pred_check
    _
  $region3: #{residual_block_2dconv.3} parent=0 // pred_check_branch
    %12 = sbr.rel (0) target = $region5
  $region4: #{residual_block_2dconv.3} parent=0 // pred_region
    _
  $region5: #{residual_block_2dconv.3} parent=0 // pred_fallthru
    _
  // Predicated region
  $region6: #{residual_block_2dconv.3} parent=0 // pred_check
    _
  $region7: #{residual_block_2dconv.3} parent=0 // pred_check_branch
    %14 = sbr.rel (0) target = $region9
  $region8: #{residual_block_2dconv.3} parent=0 // pred_region
    _
  $region9: #{residual_block_2dconv.3} parent=0 // pred_fallthru
    _
  // Predicated region
  $region10: #{residual_block_2dconv.3} parent=0 // pred_check
    _
  $region11: #{residual_block_2dconv.3} parent=0 // pred_check_branch
    %16 = sbr.rel (0) target = $region13
  $region12: #{residual_block_2dconv.3} parent=0 // pred_region
    _
  $region13: #{residual_block_2dconv.3} parent=0 // pred_fallthru
    _
  // Predicated region
  $region14: #{residual_block_2dconv.3} parent=0 // pred_check
    _
  $region15: #{residual_block_2dconv.3} parent=0 // pred_check_branch
    %18 = sbr.rel (0) target = $region17
  $region16: #{residual_block_2dconv.3} parent=0 // pred_region
    _
  $region17: #{residual_block_2dconv.3} parent=0 // pred_fallthru
    _
  // Predicated region
  $region18: #{residual_block_2dconv.3} parent=0 // pred_check
    _
  $region19: #{residual_block_2dconv.3} parent=0 // pred_check_branch
    %20 = sbr.rel (0) target = $region21
  $region20: #{residual_block_2dconv.3} parent=0 // pred_region
    _
  $region21: #{residual_block_2dconv.3} parent=0 // pred_fallthru
    _
  // Predicated region
  $region22: #{residual_block_2dconv.3} parent=0 // pred_check
    _
  $region23: #{residual_block_2dconv.3} parent=0 // pred_check_branch
    %22 = sbr.rel (0) target = $region25
  $region24: #{residual_block_2dconv.3} parent=0 // pred_region
    _
  $region25: #{residual_block_2dconv.3} parent=0 // pred_fallthru
    _
  %p24 = scmp.eq.s32.totalorder 0, 0
  // Predicated region
  $region26: #{residual_block_2dconv.3} parent=0 // pred_check
    %p25 = pneg %p24
  $region27: #{residual_block_2dconv.3} parent=0 // pred_check_branch
    %27 = sbr.rel (%p25) target = $region29
  $region28: #{residual_block_2dconv.3} parent=0 // pred_region
    %vm28 = vcmask 31744
    %29 = vst.msk [vmem:[%s6] sm:$0xff] %vm28, 0.0
    %30 = vst.msk [vmem:[%s6 + $0x8] sm:$0xff] %vm28, 0.0
    %31 = vst.msk [vmem:[%s6 + $0x10] sm:$0xff] %vm28, 0.0
    %32 = vst.msk [vmem:[%s6 + $0x18] sm:$0xff] %vm28, 0.0
    %33 = vst.msk [vmem:[%s6 + $0x20] sm:$0xff] %vm28, 0.0
    %34 = vst.msk [vmem:[%s6 + $0x28] sm:$0xff] %vm28, 0.0
    %35 = vst.msk [vmem:[%s6 + $0x30] sm:$0xff] %vm28, 0.0
    %36 = vst.msk [vmem:[%s6 + $0x38] sm:$0xff] %vm28, 0.0
    %37 = vst.msk [vmem:[%s6 + $0x40] sm:$0xff] %vm28, 0.0
    %38 = vst.msk [vmem:[%s6 + $0x48] sm:$0xff] %vm28, 0.0
    %39 = vst.msk [vmem:[%s6 + $0x50] sm:$0xff] %vm28, 0.0
    %40 = vst.msk [vmem:[%s6 + $0x58] sm:$0xff] %vm28, 0.0
    %41 = vst.msk [vmem:[%s6 + $0x60] sm:$0xff] %vm28, 0.0
    %42 = vst.msk [vmem:[%s6 + $0x68] sm:$0xff] %vm28, 0.0
    %43 = vst.msk [vmem:[%s6 + $0x70] sm:$0xff] %vm28, 0.0
    %44 = vst.msk [vmem:[%s6 + $0x78] sm:$0xff] %vm28, 0.0
    %45 = vst.msk [vmem:[%s6 + $0x80] sm:$0xff] %vm28, 0.0
    %46 = vst.msk [vmem:[%s6 + $0x88] sm:$0xff] %vm28, 0.0
    %47 = vst.msk [vmem:[%s6 + $0x90] sm:$0xff] %vm28, 0.0
    %48 = vst.msk [vmem:[%s6 + $0x98] sm:$0xff] %vm28, 0.0
    %49 = vst.msk [vmem:[%s6 + $0xa0] sm:$0xff] %vm28, 0.0
    %50 = vst.msk [vmem:[%s6 + $0xa8] sm:$0xff] %vm28, 0.0
    %51 = vst.msk [vmem:[%s6 + $0xb0] sm:$0xff] %vm28, 0.0
    %52 = vst.msk [vmem:[%s6 + $0xb8] sm:$0xff] %vm28, 0.0
    %53 = vst.msk [vmem:[%s6 + $0xc0] sm:$0xff] %vm28, 0.0
    %54 = vst.msk [vmem:[%s6 + $0xc8] sm:$0xff] %vm28, 0.0
    %55 = vst.msk [vmem:[%s6 + $0xd0] sm:$0xff] %vm28, 0.0
    %56 = vst.msk [vmem:[%s6 + $0xd8] sm:$0xff] %vm28, 0.0
    %57 = vst.msk [vmem:[%s6 + $0xe0] sm:$0xff] %vm28, 0.0
    %58 = vst.msk [vmem:[%s6 + $0xe8] sm:$0xff] %vm28, 0.0
    %59 = vst.msk [vmem:[%s6 + $0xf0] sm:$0xff] %vm28, 0.0
    %60 = vst.msk [vmem:[%s6 + $0xf8] sm:$0xff] %vm28, 0.0
    %61 = vst.msk [vmem:[%s6 + $0x100] sm:$0xff] %vm28, 0.0
    %62 = vst.msk [vmem:[%s6 + $0x108] sm:$0xff] %vm28, 0.0
    %63 = vst.msk [vmem:[%s6 + $0x110] sm:$0xff] %vm28, 0.0
    %64 = vst.msk [vmem:[%s6 + $0x118] sm:$0xff] %vm28, 0.0
    %65 = vst.msk [vmem:[%s6 + $0x120] sm:$0xff] %vm28, 0.0
    %66 = vst.msk [vmem:[%s6 + $0x128] sm:$0xff] %vm28, 0.0
    %67 = vst.msk [vmem:[%s6 + $0x130] sm:$0xff] %vm28, 0.0
    %68 = vst.msk [vmem:[%s6 + $0x138] sm:$0xff] %vm28, 0.0
    %69 = vst.msk [vmem:[%s6 + $0x140] sm:$0xff] %vm28, 0.0
    %70 = vst.msk [vmem:[%s6 + $0x148] sm:$0xff] %vm28, 0.0
    %71 = vst.msk [vmem:[%s6 + $0x150] sm:$0xff] %vm28, 0.0
    %72 = vst.msk [vmem:[%s6 + $0x158] sm:$0xff] %vm28, 0.0
    %73 = vst.msk [vmem:[%s6 + $0x160] sm:$0xff] %vm28, 0.0
    %74 = vst.msk [vmem:[%s6 + $0x168] sm:$0xff] %vm28, 0.0
    %75 = vst.msk [vmem:[%s6 + $0x170] sm:$0xff] %vm28, 0.0
    %76 = vst.msk [vmem:[%s6 + $0x178] sm:$0xff] %vm28, 0.0
    %77 = vst.msk [vmem:[%s6 + $0x180] sm:$0xff] %vm28, 0.0
    %78 = vst.msk [vmem:[%s6 + $0x188] sm:$0xff] %vm28, 0.0
    %79 = vst.msk [vmem:[%s6 + $0x190] sm:$0xff] %vm28, 0.0
    %80 = vst.msk [vmem:[%s6 + $0x198] sm:$0xff] %vm28, 0.0
    %81 = vst.msk [vmem:[%s6 + $0x1a0] sm:$0xff] %vm28, 0.0
    %82 = vst.msk [vmem:[%s6 + $0x1a8] sm:$0xff] %vm28, 0.0
    %83 = vst.msk [vmem:[%s6 + $0x1b0] sm:$0xff] %vm28, 0.0
    %84 = vst.msk [vmem:[%s6 + $0x1b8] sm:$0xff] %vm28, 0.0
    %85 = vst.msk [vmem:[%s6 + $0x1c0] sm:$0xff] %vm28, 0.0
    %86 = vst.msk [vmem:[%s6 + $0x1c8] sm:$0xff] %vm28, 0.0
    %87 = vst.msk [vmem:[%s6 + $0x1d0] sm:$0xff] %vm28, 0.0
    %88 = vst.msk [vmem:[%s6 + $0x1d8] sm:$0xff] %vm28, 0.0
    %89 = vst.msk [vmem:[%s6 + $0x1e0] sm:$0xff] %vm28, 0.0
    %90 = vst.msk [vmem:[%s6 + $0x1e8] sm:$0xff] %vm28, 0.0
    %91 = vst.msk [vmem:[%s6 + $0x1f0] sm:$0xff] %vm28, 0.0
    %92 = vst.msk [vmem:[%s6 + $0x1f8] sm:$0xff] %vm28, 0.0
  $region29: #{residual_block_2dconv.3} parent=0 // pred_fallthru
    _
  %v93 = vld [vmem:[%s0] sm:$0xf]
  %v94 = vld [vmem:[%s0 + $0x4] sm:$0xf]
  %v95 = vld [vmem:[%s0 + $0x8] sm:$0xf]
  %v96 = vld [vmem:[%s0 + $0xc] sm:$0xf]
  %v97 = vld [vmem:[%s0 + $0x10] sm:$0xf]
  %v98 = vld [vmem:[%s0 + $0x14] sm:$0xf]
  %v99 = vld [vmem:[%s0 + $0x18] sm:$0xf]
  %v100 = vld [vmem:[%s0 + $0x1c] sm:$0xf]
  %v101 = vld [vmem:[%s0 + $0x20] sm:$0xf]
  %v102 = vld [vmem:[%s0 + $0x24] sm:$0xf]
  %v103 = vld [vmem:[%s0 + $0x28] sm:$0xf]
  %v104 = vld [vmem:[%s0 + $0x2c] sm:$0xf]
  %v105 = vld [vmem:[%s0 + $0x30] sm:$0xf]
  %v106 = vld [vmem:[%s0 + $0x34] sm:$0xf]
  %v107 = vld [vmem:[%s0 + $0x38] sm:$0xf]
  %v108 = vld [vmem:[%s0 + $0x3c] sm:$0xf]
  %v109 = vld [vmem:[%s0 + $0x40] sm:$0xf]
  %v110 = vld [vmem:[%s0 + $0x44] sm:$0xf]
  %v111 = vld [vmem:[%s0 + $0x48] sm:$0xf]
  %v112 = vld [vmem:[%s0 + $0x4c] sm:$0xf]
  %v113 = vld [vmem:[%s0 + $0x50] sm:$0xf]
  %v114 = vld [vmem:[%s0 + $0x54] sm:$0xf]
  %v115 = vld [vmem:[%s0 + $0x58] sm:$0xf]
  %v116 = vld [vmem:[%s0 + $0x5c] sm:$0xf]
  %v117 = vld [vmem:[%s0 + $0x60] sm:$0xf]
  %v118 = vld [vmem:[%s0 + $0x64] sm:$0xf]
  %v119 = vld [vmem:[%s0 + $0x68] sm:$0xf]
  %v120 = vld [vmem:[%s0 + $0x6c] sm:$0xf]
  %v121 = vld [vmem:[%s0 + $0x70] sm:$0xf]
  %v122 = vld [vmem:[%s0 + $0x74] sm:$0xf]
  %v123 = vld [vmem:[%s0 + $0x78] sm:$0xf]
  %v124 = vld [vmem:[%s0 + $0x7c] sm:$0xf]
  %v125 = vld [vmem:[%s0 + $0x80] sm:$0xf]
  %v126 = vld [vmem:[%s0 + $0x84] sm:$0xf]
  %v127 = vld [vmem:[%s0 + $0x88] sm:$0xf]
  %v128 = vld [vmem:[%s0 + $0x8c] sm:$0xf]
  %v129 = vld [vmem:[%s0 + $0x90] sm:$0xf]
  %v130 = vld [vmem:[%s0 + $0x94] sm:$0xf]
  %v131 = vld [vmem:[%s0 + $0x98] sm:$0xf]
  %v132 = vld [vmem:[%s0 + $0x9c] sm:$0xf]
  %v133 = vld [vmem:[%s0 + $0xa0] sm:$0xf]
  %v134 = vld [vmem:[%s0 + $0xa4] sm:$0xf]
  %v135 = vld [vmem:[%s0 + $0xa8] sm:$0xf]
  %v136 = vld [vmem:[%s0 + $0xac] sm:$0xf]
  %v137 = vld [vmem:[%s0 + $0xb0] sm:$0xf]
  %v138 = vld [vmem:[%s0 + $0xb4] sm:$0xf]
  %v139 = vld [vmem:[%s0 + $0xb8] sm:$0xf]
  %v140 = vld [vmem:[%s0 + $0xbc] sm:$0xf]
  %v141 = vld [vmem:[%s0 + $0xc0] sm:$0xf]
  %v142 = vld [vmem:[%s0 + $0xc4] sm:$0xf]
  %v143 = vld [vmem:[%s0 + $0xc8] sm:$0xf]
  %v144 = vld [vmem:[%s0 + $0xcc] sm:$0xf]
  %v145 = vld [vmem:[%s0 + $0xd0] sm:$0xf]
  %v146 = vld [vmem:[%s0 + $0xd4] sm:$0xf]
  %v147 = vld [vmem:[%s0 + $0xd8] sm:$0xf]
  %v148 = vld [vmem:[%s0 + $0xdc] sm:$0xf]
  %v149 = vld [vmem:[%s0 + $0xe0] sm:$0xf]
  %v150 = vld [vmem:[%s0 + $0xe4] sm:$0xf]
  %v151 = vld [vmem:[%s0 + $0xe8] sm:$0xf]
  %v152 = vld [vmem:[%s0 + $0xec] sm:$0xf]
  %v153 = vld [vmem:[%s0 + $0xf0] sm:$0xf]
  %v154 = vld [vmem:[%s0 + $0xf4] sm:$0xf]
  %v155 = vld [vmem:[%s0 + $0xf8] sm:$0xf]
  %v156 = vld [vmem:[%s0 + $0xfc] sm:$0xf]
  %v157 = vld [vmem:[%s2] sm:$0x1]
  %v158 = vunpack.c.l.bf16 %v93
  %v159 = vunpack.c.l.bf16 %v94
  %v160 = vunpack.c.l.bf16 %v95
  %v161 = vunpack.c.l.bf16 %v96
  %v162 = vunpack.c.l.bf16 %v97
  %v163 = vunpack.c.l.bf16 %v98
  %v164 = vunpack.c.l.bf16 %v99
  %v165 = vunpack.c.l.bf16 %v100
  %v166 = vunpack.c.l.bf16 %v101
  %v167 = vunpack.c.l.bf16 %v102
  %v168 = vunpack.c.l.bf16 %v103
  %v169 = vunpack.c.l.bf16 %v104
  %v170 = vunpack.c.l.bf16 %v105
  %v171 = vunpack.c.l.bf16 %v106
  %v172 = vunpack.c.l.bf16 %v107
  %v173 = vunpack.c.l.bf16 %v108
  %v174 = vunpack.c.l.bf16 %v109
  %v175 = vunpack.c.l.bf16 %v110
  %v176 = vunpack.c.l.bf16 %v111
  %v177 = vunpack.c.l.bf16 %v112
  %v178 = vunpack.c.l.bf16 %v113
  %v179 = vunpack.c.l.bf16 %v114
  %v180 = vunpack.c.l.bf16 %v115
  %v181 = vunpack.c.l.bf16 %v116
  %v182 = vunpack.c.l.bf16 %v117
  %v183 = vunpack.c.l.bf16 %v118
  %v184 = vunpack.c.l.bf16 %v119
  %v185 = vunpack.c.l.bf16 %v120
  %v186 = vunpack.c.l.bf16 %v121
  %v187 = vunpack.c.l.bf16 %v122
  %v188 = vunpack.c.l.bf16 %v123
  %v189 = vunpack.c.l.bf16 %v124
  %v190 = vunpack.c.l.bf16 %v125
  %v191 = vunpack.c.l.bf16 %v126
  %v192 = vunpack.c.l.bf16 %v127
  %v193 = vunpack.c.l.bf16 %v128
  %v194 = vunpack.c.l.bf16 %v129
  %v195 = vunpack.c.l.bf16 %v130
  %v196 = vunpack.c.l.bf16 %v131
  %v197 = vunpack.c.l.bf16 %v132
  %v198 = vunpack.c.l.bf16 %v133
  %v199 = vunpack.c.l.bf16 %v134
  %v200 = vunpack.c.l.bf16 %v135
  %v201 = vunpack.c.l.bf16 %v136
  %v202 = vunpack.c.l.bf16 %v137
  %v203 = vunpack.c.l.bf16 %v138
  %v204 = vunpack.c.l.bf16 %v139
  %v205 = vunpack.c.l.bf16 %v140
  %v206 = vunpack.c.l.bf16 %v141
  %v207 = vunpack.c.l.bf16 %v142
  %v208 = vunpack.c.l.bf16 %v143
  %v209 = vunpack.c.l.bf16 %v144
  %v210 = vunpack.c.l.bf16 %v145
  %v211 = vunpack.c.l.bf16 %v146
  %v212 = vunpack.c.l.bf16 %v147
  %v213 = vunpack.c.l.bf16 %v148
  %v214 = vunpack.c.l.bf16 %v149
  %v215 = vunpack.c.l.bf16 %v150
  %v216 = vunpack.c.l.bf16 %v151
  %v217 = vunpack.c.l.bf16 %v152
  %v218 = vunpack.c.l.bf16 %v153
  %v219 = vunpack.c.l.bf16 %v154
  %v220 = vunpack.c.l.bf16 %v155
  %v221 = vunpack.c.l.bf16 %v156
  %v223 = vlaneseq
  %v224 = vshrl.u32 %v223, 7
  %v225 = vsub.s32 0, %v224
  %v226 = vrot.slane %v157, %v225
  %v228 = vmul.f32 %v158, %v226
  %v229 = vmul.f32 %v159, %v226
  %v230 = vmul.f32 %v160, %v226
  %v231 = vmul.f32 %v161, %v226
  %v232 = vmul.f32 %v162, %v226
  %v233 = vmul.f32 %v163, %v226
  %v234 = vmul.f32 %v164, %v226
  %v235 = vmul.f32 %v165, %v226
  %v236 = vmul.f32 %v166, %v226
  %v237 = vmul.f32 %v167, %v226
  %v238 = vmul.f32 %v168, %v226
  %v239 = vmul.f32 %v169, %v226
  %v240 = vmul.f32 %v170, %v226
  %v241 = vmul.f32 %v171, %v226
  %v242 = vmul.f32 %v172, %v226
  %v243 = vmul.f32 %v173, %v226
  %v244 = vmul.f32 %v174, %v226
  %v245 = vmul.f32 %v175, %v226
  %v246 = vmul.f32 %v176, %v226
  %v247 = vmul.f32 %v177, %v226
  %v248 = vmul.f32 %v178, %v226
  %v249 = vmul.f32 %v179, %v226
  %v250 = vmul.f32 %v180, %v226
  %v251 = vmul.f32 %v181, %v226
  %v252 = vmul.f32 %v182, %v226
  %v253 = vmul.f32 %v183, %v226
  %v254 = vmul.f32 %v184, %v226
  %v255 = vmul.f32 %v185, %v226
  %v256 = vmul.f32 %v186, %v226
  %v257 = vmul.f32 %v187, %v226
  %v258 = vmul.f32 %v188, %v226
  %v259 = vmul.f32 %v189, %v226
  %v260 = vmul.f32 %v190, %v226
  %v261 = vmul.f32 %v191, %v226
  %v262 = vmul.f32 %v192, %v226
  %v263 = vmul.f32 %v193, %v226
  %v264 = vmul.f32 %v194, %v226
  %v265 = vmul.f32 %v195, %v226
  %v266 = vmul.f32 %v196, %v226
  %v267 = vmul.f32 %v197, %v226
  %v268 = vmul.f32 %v198, %v226
  %v269 = vmul.f32 %v199, %v226
  %v270 = vmul.f32 %v200, %v226
  %v271 = vmul.f32 %v201, %v226
  %v272 = vmul.f32 %v202, %v226
  %v273 = vmul.f32 %v203, %v226
  %v274 = vmul.f32 %v204, %v226
  %v275 = vmul.f32 %v205, %v226
  %v276 = vmul.f32 %v206, %v226
  %v277 = vmul.f32 %v207, %v226
  %v278 = vmul.f32 %v208, %v226
  %v279 = vmul.f32 %v209, %v226
  %v280 = vmul.f32 %v210, %v226
  %v281 = vmul.f32 %v211, %v226
  %v282 = vmul.f32 %v212, %v226
  %v283 = vmul.f32 %v213, %v226
  %v284 = vmul.f32 %v214, %v226
  %v285 = vmul.f32 %v215, %v226
  %v286 = vmul.f32 %v216, %v226
  %v287 = vmul.f32 %v217, %v226
  %v288 = vmul.f32 %v218, %v226
  %v289 = vmul.f32 %v219, %v226
  %v290 = vmul.f32 %v220, %v226
  %v291 = vmul.f32 %v221, %v226
  %v292 = vld [vmem:[%s3] sm:$0x1]
  %v294 = vlaneseq
  %v295 = vshrl.u32 %v294, 7
  %v296 = vsub.s32 0, %v295
  %v297 = vrot.slane %v292, %v296
  %v299 = vadd.f32 %v228, %v297
  %v300 = vadd.f32 %v229, %v297
  %v301 = vadd.f32 %v230, %v297
  %v302 = vadd.f32 %v231, %v297
  %v303 = vadd.f32 %v232, %v297
  %v304 = vadd.f32 %v233, %v297
  %v305 = vadd.f32 %v234, %v297
  %v306 = vadd.f32 %v235, %v297
  %v307 = vadd.f32 %v236, %v297
  %v308 = vadd.f32 %v237, %v297
  %v309 = vadd.f32 %v238, %v297
  %v310 = vadd.f32 %v239, %v297
  %v311 = vadd.f32 %v240, %v297
  %v312 = vadd.f32 %v241, %v297
  %v313 = vadd.f32 %v242, %v297
  %v314 = vadd.f32 %v243, %v297
  %v315 = vadd.f32 %v244, %v297
  %v316 = vadd.f32 %v245, %v297
  %v317 = vadd.f32 %v246, %v297
  %v318 = vadd.f32 %v247, %v297
  %v319 = vadd.f32 %v248, %v297
  %v320 = vadd.f32 %v249, %v297
  %v321 = vadd.f32 %v250, %v297
  %v322 = vadd.f32 %v251, %v297
  %v323 = vadd.f32 %v252, %v297
  %v324 = vadd.f32 %v253, %v297
  %v325 = vadd.f32 %v254, %v297
  %v326 = vadd.f32 %v255, %v297
  %v327 = vadd.f32 %v256, %v297
  %v328 = vadd.f32 %v257, %v297
  %v329 = vadd.f32 %v258, %v297
  %v330 = vadd.f32 %v259, %v297
  %v331 = vadd.f32 %v260, %v297
  %v332 = vadd.f32 %v261, %v297
  %v333 = vadd.f32 %v262, %v297
  %v334 = vadd.f32 %v263, %v297
  %v335 = vadd.f32 %v264, %v297
  %v336 = vadd.f32 %v265, %v297
  %v337 = vadd.f32 %v266, %v297
  %v338 = vadd.f32 %v267, %v297
  %v339 = vadd.f32 %v268, %v297
  %v340 = vadd.f32 %v269, %v297
  %v341 = vadd.f32 %v270, %v297
  %v342 = vadd.f32 %v271, %v297
  %v343 = vadd.f32 %v272, %v297
  %v344 = vadd.f32 %v273, %v297
  %v345 = vadd.f32 %v274, %v297
  %v346 = vadd.f32 %v275, %v297
  %v347 = vadd.f32 %v276, %v297
  %v348 = vadd.f32 %v277, %v297
  %v349 = vadd.f32 %v278, %v297
  %v350 = vadd.f32 %v279, %v297
  %v351 = vadd.f32 %v280, %v297
  %v352 = vadd.f32 %v281, %v297
  %v353 = vadd.f32 %v282, %v297
  %v354 = vadd.f32 %v283, %v297
  %v355 = vadd.f32 %v284, %v297
  %v356 = vadd.f32 %v285, %v297
  %v357 = vadd.f32 %v286, %v297
  %v358 = vadd.f32 %v287, %v297
  %v359 = vadd.f32 %v288, %v297
  %v360 = vadd.f32 %v289, %v297
  %v361 = vadd.f32 %v290, %v297
  %v362 = vadd.f32 %v291, %v297
  %v363 = vmax.f32 %v299, 0.0
  %v364 = vmax.f32 %v300, 0.0
  %v365 = vmax.f32 %v301, 0.0
  %v366 = vmax.f32 %v302, 0.0
  %v367 = vmax.f32 %v303, 0.0
  %v368 = vmax.f32 %v304, 0.0
  %v369 = vmax.f32 %v305, 0.0
  %v370 = vmax.f32 %v306, 0.0
  %v371 = vmax.f32 %v307, 0.0
  %v372 = vmax.f32 %v308, 0.0
  %v373 = vmax.f32 %v309, 0.0
  %v374 = vmax.f32 %v310, 0.0
  %v375 = vmax.f32 %v311, 0.0
  %v376 = vmax.f32 %v312, 0.0
  %v377 = vmax.f32 %v313, 0.0
  %v378 = vmax.f32 %v314, 0.0
  %v379 = vmax.f32 %v315, 0.0
  %v380 = vmax.f32 %v316, 0.0
  %v381 = vmax.f32 %v317, 0.0
  %v382 = vmax.f32 %v318, 0.0
  %v383 = vmax.f32 %v319, 0.0
  %v384 = vmax.f32 %v320, 0.0
  %v385 = vmax.f32 %v321, 0.0
  %v386 = vmax.f32 %v322, 0.0
  %v387 = vmax.f32 %v323, 0.0
  %v388 = vmax.f32 %v324, 0.0
  %v389 = vmax.f32 %v325, 0.0
  %v390 = vmax.f32 %v326, 0.0
  %v391 = vmax.f32 %v327, 0.0
  %v392 = vmax.f32 %v328, 0.0
  %v393 = vmax.f32 %v329, 0.0
  %v394 = vmax.f32 %v330, 0.0
  %v395 = vmax.f32 %v331, 0.0
  %v396 = vmax.f32 %v332, 0.0
  %v397 = vmax.f32 %v333, 0.0
  %v398 = vmax.f32 %v334, 0.0
  %v399 = vmax.f32 %v335, 0.0
  %v400 = vmax.f32 %v336, 0.0
  %v401 = vmax.f32 %v337, 0.0
  %v402 = vmax.f32 %v338, 0.0
  %v403 = vmax.f32 %v339, 0.0
  %v404 = vmax.f32 %v340, 0.0
  %v405 = vmax.f32 %v341, 0.0
  %v406 = vmax.f32 %v342, 0.0
  %v407 = vmax.f32 %v343, 0.0
  %v408 = vmax.f32 %v344, 0.0
  %v409 = vmax.f32 %v345, 0.0
  %v410 = vmax.f32 %v346, 0.0
  %v411 = vmax.f32 %v347, 0.0
  %v412 = vmax.f32 %v348, 0.0
  %v413 = vmax.f32 %v349, 0.0
  %v414 = vmax.f32 %v350, 0.0
  %v415 = vmax.f32 %v351, 0.0
  %v416 = vmax.f32 %v352, 0.0
  %v417 = vmax.f32 %v353, 0.0
  %v418 = vmax.f32 %v354, 0.0
  %v419 = vmax.f32 %v355, 0.0
  %v420 = vmax.f32 %v356, 0.0
  %v421 = vmax.f32 %v357, 0.0
  %v422 = vmax.f32 %v358, 0.0
  %v423 = vmax.f32 %v359, 0.0
  %v424 = vmax.f32 %v360, 0.0
  %v425 = vmax.f32 %v361, 0.0
  %v426 = vmax.f32 %v362, 0.0
  %v427 = vpack.c.bf16 %v364, %v363
  %v428 = vpack.c.bf16 %v366, %v365
  %v429 = vpack.c.bf16 %v368, %v367
  %v430 = vpack.c.bf16 %v370, %v369
  %v431 = vpack.c.bf16 %v372, %v371
  %v432 = vpack.c.bf16 %v374, %v373
  %v433 = vpack.c.bf16 %v376, %v375
  %v434 = vpack.c.bf16 %v378, %v377
  %v435 = vpack.c.bf16 %v380, %v379
  %v436 = vpack.c.bf16 %v382, %v381
  %v437 = vpack.c.bf16 %v384, %v383
  %v438 = vpack.c.bf16 %v386, %v385
  %v439 = vpack.c.bf16 %v388, %v387
  %v440 = vpack.c.bf16 %v390, %v389
  %v441 = vpack.c.bf16 %v392, %v391
  %v442 = vpack.c.bf16 %v394, %v393
  %v443 = vpack.c.bf16 %v396, %v395
  %v444 = vpack.c.bf16 %v398, %v397
  %v445 = vpack.c.bf16 %v400, %v399
  %v446 = vpack.c.bf16 %v402, %v401
  %v447 = vpack.c.bf16 %v404, %v403
  %v448 = vpack.c.bf16 %v406, %v405
  %v449 = vpack.c.bf16 %v408, %v407
  %v450 = vpack.c.bf16 %v410, %v409
  %v451 = vpack.c.bf16 %v412, %v411
  %v452 = vpack.c.bf16 %v414, %v413
  %v453 = vpack.c.bf16 %v416, %v415
  %v454 = vpack.c.bf16 %v418, %v417
  %v455 = vpack.c.bf16 %v420, %v419
  %v456 = vpack.c.bf16 %v422, %v421
  %v457 = vpack.c.bf16 %v424, %v423
  %v458 = vpack.c.bf16 %v426, %v425
  %v459 = vld [vmem:[%s6] sm:$0xff]
  %v460 = vld [vmem:[%s6 + $0x8] sm:$0xff]
  %v461 = vld [vmem:[%s6 + $0x10] sm:$0xff]
  %v462 = vld [vmem:[%s6 + $0x18] sm:$0xff]
  %v463 = vld [vmem:[%s6 + $0x20] sm:$0xff]
  %v464 = vld [vmem:[%s6 + $0x28] sm:$0xff]
  %v465 = vld [vmem:[%s6 + $0x30] sm:$0xff]
  %v466 = vld [vmem:[%s6 + $0x38] sm:$0xff]
  %v467 = vld [vmem:[%s6 + $0x40] sm:$0xff]
  %v468 = vld [vmem:[%s6 + $0x48] sm:$0xff]
  %v469 = vld [vmem:[%s6 + $0x50] sm:$0xff]
  %v470 = vld [vmem:[%s6 + $0x58] sm:$0xff]
  %v471 = vld [vmem:[%s6 + $0x60] sm:$0xff]
  %v472 = vld [vmem:[%s6 + $0x68] sm:$0xff]
  %v473 = vld [vmem:[%s6 + $0x70] sm:$0xff]
  %v474 = vld [vmem:[%s6 + $0x78] sm:$0xff]
  %v475 = vld [vmem:[%s6 + $0x80] sm:$0xff]
  %v476 = vld [vmem:[%s6 + $0x88] sm:$0xff]
  %v477 = vld [vmem:[%s6 + $0x90] sm:$0xff]
  %v478 = vld [vmem:[%s6 + $0x98] sm:$0xff]
  %v479 = vld [vmem:[%s6 + $0xa0] sm:$0xff]
  %v480 = vld [vmem:[%s6 + $0xa8] sm:$0xff]
  %v481 = vld [vmem:[%s6 + $0xb0] sm:$0xff]
  %v482 = vld [vmem:[%s6 + $0xb8] sm:$0xff]
  %v483 = vld [vmem:[%s6 + $0xc0] sm:$0xff]
  %v484 = vld [vmem:[%s6 + $0xc8] sm:$0xff]
  %v485 = vld [vmem:[%s6 + $0xd0] sm:$0xff]
  %v486 = vld [vmem:[%s6 + $0xd8] sm:$0xff]
  %v487 = vld [vmem:[%s6 + $0xe0] sm:$0xff]
  %v488 = vld [vmem:[%s6 + $0xe8] sm:$0xff]
  %v489 = vld [vmem:[%s6 + $0xf0] sm:$0xff]
  %v490 = vld [vmem:[%s6 + $0xf8] sm:$0xff]
  %v491 = vld [vmem:[%s6 + $0x100] sm:$0xff]
  %v492 = vld [vmem:[%s6 + $0x108] sm:$0xff]
  %v493 = vld [vmem:[%s6 + $0x110] sm:$0xff]
  %v494 = vld [vmem:[%s6 + $0x118] sm:$0xff]
  %v495 = vld [vmem:[%s6 + $0x120] sm:$0xff]
  %v496 = vld [vmem:[%s6 + $0x128] sm:$0xff]
  %v497 = vld [vmem:[%s6 + $0x130] sm:$0xff]
  %v498 = vld [vmem:[%s6 + $0x138] sm:$0xff]
  %v499 = vld [vmem:[%s6 + $0x140] sm:$0xff]
  %v500 = vld [vmem:[%s6 + $0x148] sm:$0xff]
  %v501 = vld [vmem:[%s6 + $0x150] sm:$0xff]
  %v502 = vld [vmem:[%s6 + $0x158] sm:$0xff]
  %v503 = vld [vmem:[%s6 + $0x160] sm:$0xff]
  %v504 = vld [vmem:[%s6 + $0x168] sm:$0xff]
  %v505 = vld [vmem:[%s6 + $0x170] sm:$0xff]
  %v506 = vld [vmem:[%s6 + $0x178] sm:$0xff]
  %v507 = vld [vmem:[%s6 + $0x180] sm:$0xff]
  %v508 = vld [vmem:[%s6 + $0x188] sm:$0xff]
  %v509 = vld [vmem:[%s6 + $0x190] sm:$0xff]
  %v510 = vld [vmem:[%s6 + $0x198] sm:$0xff]
  %v511 = vld [vmem:[%s6 + $0x1a0] sm:$0xff]
  %v512 = vld [vmem:[%s6 + $0x1a8] sm:$0xff]
  %v513 = vld [vmem:[%s6 + $0x1b0] sm:$0xff]
  %v514 = vld [vmem:[%s6 + $0x1b8] sm:$0xff]
  %v515 = vld [vmem:[%s6 + $0x1c0] sm:$0xff]
  %v516 = vld [vmem:[%s6 + $0x1c8] sm:$0xff]
  %v517 = vld [vmem:[%s6 + $0x1d0] sm:$0xff]
  %v518 = vld [vmem:[%s6 + $0x1d8] sm:$0xff]
  %v519 = vld [vmem:[%s6 + $0x1e0] sm:$0xff]
  %v520 = vld [vmem:[%s6 + $0x1e8] sm:$0xff]
  %v521 = vld [vmem:[%s6 + $0x1f0] sm:$0xff]
  %v522 = vld [vmem:[%s6 + $0x1f8] sm:$0xff]
  %v523 = vld [vmem:[%s1] sm:$0x3]
  %vm524 = vcmask 31744
  %v526 = vsel %vm524, %v427, 0
  %v529 = vsel %vm524, %v428, 0
  %v532 = vsel %vm524, %v429, 0
  %v535 = vsel %vm524, %v430, 0
  %v538 = vsel %vm524, %v431, 0
  %v541 = vsel %vm524, %v432, 0
  %v544 = vsel %vm524, %v433, 0
  %v547 = vsel %vm524, %v434, 0
  %v550 = vsel %vm524, %v435, 0
  %v553 = vsel %vm524, %v436, 0
  %v556 = vsel %vm524, %v437, 0
  %v559 = vsel %vm524, %v438, 0
  %v562 = vsel %vm524, %v439, 0
  %v565 = vsel %vm524, %v440, 0
  %v568 = vsel %vm524, %v441, 0
  %v571 = vsel %vm524, %v442, 0
  %v574 = vsel %vm524, %v443, 0
  %v577 = vsel %vm524, %v444, 0
  %v580 = vsel %vm524, %v445, 0
  %v583 = vsel %vm524, %v446, 0
  %v586 = vsel %vm524, %v447, 0
  %v589 = vsel %vm524, %v448, 0
  %v592 = vsel %vm524, %v449, 0
  %v595 = vsel %vm524, %v450, 0
  %v598 = vsel %vm524, %v451, 0
  %v601 = vsel %vm524, %v452, 0
  %v604 = vsel %vm524, %v453, 0
  %v607 = vsel %vm524, %v454, 0
  %v610 = vsel %vm524, %v455, 0
  %v613 = vsel %vm524, %v456, 0
  %v616 = vsel %vm524, %v457, 0
  %v619 = vsel %vm524, %v458, 0
  %vm621 = vcmask 1041408
  %v623 = vsel %vm621, %v523, 0
  %625 = vmatprep.subr.bf16.mxu0 0
  %626 = vmatpush1.bf16.msra.mxu0 %v623
  %627 = vmatprep.subr.bf16.mxu0 0
  %628 = vmatpush1.bf16.msra.mxu0 0
  %629 = vmatprep.subr.bf16.mxu0 0
  %630 = vmatpush1.bf16.msra.mxu0 0
  %631 = vmatprep.subr.bf16.mxu0 0
  %632 = vmatpush1.bf16.msra.mxu0 0
  %633 = vmatprep.subr.bf16.mxu0 0
  %634 = vmatpush1.bf16.msra.mxu0 0
  %635 = vmatprep.subr.bf16.mxu0 0
  %636 = vmatpush1.bf16.msra.mxu0 0
  %637 = vmatprep.subr.bf16.mxu0 0
  %638 = vmatpush1.bf16.msra.mxu0 0
  %639 = vmatprep.subr.bf16.mxu0 0
  %640 = vmatpush1.bf16.msra.mxu0 0
  %641 = vmatprep.subr.bf16.mxu0 0
  %642 = vmatpush1.bf16.msra.mxu0 0
  %643 = vmatprep.subr.bf16.mxu0 0
  %644 = vmatpush1.bf16.msra.mxu0 0
  %645 = vmatprep.subr.bf16.mxu0 0
  %646 = vmatpush1.bf16.msra.mxu0 0
  %647 = vmatprep.subr.bf16.mxu0 0
  %648 = vmatpush1.bf16.msra.mxu0 0
  %649 = vmatprep.subr.bf16.mxu0 0
  %650 = vmatpush1.bf16.msra.mxu0 0
  %651 = vmatprep.subr.bf16.mxu0 0
  %652 = vmatpush1.bf16.msra.mxu0 0
  %653 = vmatprep.subr.bf16.mxu0 0
  %654 = vmatpush1.bf16.msra.mxu0 0
  %655 = vmatprep.subr.bf16.mxu0 0
  %656 = vmatpush1.bf16.msra.mxu0 0
  %657 = vmatprep.mubr.bf16.mxu0 0
  %658 = vmatmul.mubr.bf16.gmra.mrb[0].mxu0 %v526
  %v659 = vpop.f32.mrb[0].mxu0
  %v660 = vadd.f32 0.0, %v659
  %v661 = vpop.f32.mrb[0].mxu0
  %v662 = vpop.f32.mrb[0].mxu0
  %v663 = vadd.f32 0.0, %v662
  %v664 = vpop.f32.mrb[0].mxu0
  %665 = vmatprep.mubr.bf16.mxu0 0
  %666 = vmatmul.mubr.bf16.gmra.mrb[0].mxu0 %v529
  %v667 = vpop.f32.mrb[0].mxu0
  %v668 = vadd.f32 0.0, %v667
  %v669 = vpop.f32.mrb[0].mxu0
  %v670 = vpop.f32.mrb[0].mxu0
  %v671 = vadd.f32 0.0, %v670
  %v672 = vpop.f32.mrb[0].mxu0
  %673 = vmatprep.mubr.bf16.mxu0 0
  %674 = vmatmul.mubr.bf16.gmra.mrb[0].mxu0 %v532
  %v675 = vpop.f32.mrb[0].mxu0
  %v676 = vadd.f32 0.0, %v675
  %v677 = vpop.f32.mrb[0].mxu0
  %v678 = vpop.f32.mrb[0].mxu0
  %v679 = vadd.f32 0.0, %v678
  %v680 = vpop.f32.mrb[0].mxu0
  %681 = vmatprep.mubr.bf16.mxu0 0
  %682 = vmatmul.mubr.bf16.gmra.mrb[0].mxu0 %v535
  %v683 = vpop.f32.mrb[0].mxu0
  %v684 = vadd.f32 0.0, %v683
  %v685 = vpop.f32.mrb[0].mxu0
  %v686 = vpop.f32.mrb[0].mxu0
  %v687 = vadd.f32 0.0, %v686
  %v688 = vpop.f32.mrb[0].mxu0
  %689 = vmatprep.mubr.bf16.mxu0 0
  %690 = vmatmul.mubr.bf16.gmra.mrb[0].mxu0 %v538
  %v691 = vpop.f32.mrb[0].mxu0
  %v692 = vadd.f32 0.0, %v691
  %v693 = vpop.f32.mrb[0].mxu0
  %v694 = vpop.f32.mrb[0].mxu0
  %v695 = vadd.f32 0.0, %v694
  %v696 = vpop.f32.mrb[0].mxu0
  %697 = vmatprep.mubr.bf16.mxu0 0
  %698 = vmatmul.mubr.bf16.gmra.mrb[0].mxu0 %v541
  %v699 = vpop.f32.mrb[0].mxu0
  %v700 = vadd.f32 0.0, %v699
  %v701 = vpop.f32.mrb[0].mxu0
  %v702 = vpop.f32.mrb[0].mxu0
  %v703 = vadd.f32 0.0, %v702
  %v704 = vpop.f32.mrb[0].mxu0
  %705 = vmatprep.mubr.bf16.mxu0 0
  %706 = vmatmul.mubr.bf16.gmra.mrb[0].mxu0 %v544
  %v707 = vpop.f32.mrb[0].mxu0
  %v708 = vadd.f32 0.0, %v707
  %v709 = vpop.f32.mrb[0].mxu0
  %v710 = vpop.f32.mrb[0].mxu0
  %v711 = vadd.f32 0.0, %v710
  %v712 = vpop.f32.mrb[0].mxu0
  %713 = vmatprep.mubr.bf16.mxu0 0
  %714 = vmatmul.mubr.bf16.gmra.mrb[0].mxu0 %v547
  %v715 = vpop.f32.mrb[0].mxu0
  %v716 = vadd.f32 0.0, %v715
  %v717 = vpop.f32.mrb[0].mxu0
  %v718 = vpop.f32.mrb[0].mxu0
  %v719 = vadd.f32 0.0, %v718
  %v720 = vpop.f32.mrb[0].mxu0
  %721 = vmatprep.mubr.bf16.mxu0 0
  %722 = vmatmul.mubr.bf16.gmra.mrb[0].mxu0 %v550
  %v723 = vpop.f32.mrb[0].mxu0
  %v724 = vadd.f32 0.0, %v723
  %v725 = vpop.f32.mrb[0].mxu0
  %v726 = vpop.f32.mrb[0].mxu0
  %v727 = vadd.f32 0.0, %v726
  %v728 = vpop.f32.mrb[0].mxu0
  %729 = vmatprep.mubr.bf16.mxu0 0
  %730 = vmatmul.mubr.bf16.gmra.mrb[0].mxu0 %v553
  %v731 = vpop.f32.mrb[0].mxu0
  %v732 = vadd.f32 0.0, %v731
  %v733 = vpop.f32.mrb[0].mxu0
  %v734 = vpop.f32.mrb[0].mxu0
  %v735 = vadd.f32 0.0, %v734
  %v736 = vpop.f32.mrb[0].mxu0
  %737 = vmatprep.mubr.bf16.mxu0 0
  %738 = vmatmul.mubr.bf16.gmra.mrb[0].mxu0 %v556
  %v739 = vpop.f32.mrb[0].mxu0
  %v740 = vadd.f32 0.0, %v739
  %v741 = vpop.f32.mrb[0].mxu0
  %v742 = vpop.f32.mrb[0].mxu0
  %v743 = vadd.f32 0.0, %v742
  %v744 = vpop.f32.mrb[0].mxu0
  %745 = vmatprep.mubr.bf16.mxu0 0
  %746 = vmatmul.mubr.bf16.gmra.mrb[0].mxu0 %v559
  %v747 = vpop.f32.mrb[0].mxu0
  %v748 = vadd.f32 0.0, %v747
  %v749 = vpop.f32.mrb[0].mxu0
  %v750 = vpop.f32.mrb[0].mxu0
  %v751 = vadd.f32 0.0, %v750
  %v752 = vpop.f32.mrb[0].mxu0
  %753 = vmatprep.mubr.bf16.mxu0 0
  %754 = vmatmul.mubr.bf16.gmra.mrb[0].mxu0 %v562
  %v755 = vpop.f32.mrb[0].mxu0
  %v756 = vadd.f32 0.0, %v755
  %v757 = vpop.f32.mrb[0].mxu0
  %v758 = vpop.f32.mrb[0].mxu0
  %v759 = vadd.f32 0.0, %v758
  %v760 = vpop.f32.mrb[0].mxu0
  %761 = vmatprep.mubr.bf16.mxu0 0
  %762 = vmatmul.mubr.bf16.gmra.mrb[0].mxu0 %v565
  %v763 = vpop.f32.mrb[0].mxu0
  %v764 = vadd.f32 0.0, %v763
  %v765 = vpop.f32.mrb[0].mxu0
  %v766 = vpop.f32.mrb[0].mxu0
  %v767 = vadd.f32 0.0, %v766
  %v768 = vpop.f32.mrb[0].mxu0
  %769 = vmatprep.mubr.bf16.mxu0 0
  %770 = vmatmul.mubr.bf16.gmra.mrb[0].mxu0 %v568
  %v771 = vpop.f32.mrb[0].mxu0
  %v772 = vadd.f32 0.0, %v771
  %v773 = vpop.f32.mrb[0].mxu0
  %v774 = vpop.f32.mrb[0].mxu0
  %v775 = vadd.f32 0.0, %v774
  %v776 = vpop.f32.mrb[0].mxu0
  %777 = vmatprep.mubr.bf16.mxu0 0
  %778 = vmatmul.mubr.bf16.gmra.mrb[0].mxu0 %v571
  %v779 = vpop.f32.mrb[0].mxu0
  %v780 = vadd.f32 0.0, %v779
  %v781 = vpop.f32.mrb[0].mxu0
  %v782 = vpop.f32.mrb[0].mxu0
  %v783 = vadd.f32 0.0, %v782
  %v784 = vpop.f32.mrb[0].mxu0
  %785 = vmatprep.mubr.bf16.mxu0 0
  %786 = vmatmul.mubr.bf16.gmra.mrb[0].mxu0 %v574
  %v787 = vpop.f32.mrb[0].mxu0
  %v788 = vadd.f32 0.0, %v787
  %v789 = vpop.f32.mrb[0].mxu0
  %v790 = vpop.f32.mrb[0].mxu0
  %v791 = vadd.f32 0.0, %v790
  %v792 = vpop.f32.mrb[0].mxu0
  %793 = vmatprep.mubr.bf16.mxu0 0
  %794 = vmatmul.mubr.bf16.gmra.mrb[0].mxu0 %v577
  %v795 = vpop.f32.mrb[0].mxu0
  %v796 = vadd.f32 0.0, %v795
  %v797 = vpop.f32.mrb[0].mxu0
  %v798 = vpop.f32.mrb[0].mxu0
  %v799 = vadd.f32 0.0, %v798
  %v800 = vpop.f32.mrb[0].mxu0
  %801 = vmatprep.mubr.bf16.mxu0 0
  %802 = vmatmul.mubr.bf16.gmra.mrb[0].mxu0 %v580
  %v803 = vpop.f32.mrb[0].mxu0
  %v804 = vadd.f32 0.0, %v803
  %v805 = vpop.f32.mrb[0].mxu0
  %v806 = vpop.f32.mrb[0].mxu0
  %v807 = vadd.f32 0.0, %v806
  %v808 = vpop.f32.mrb[0].mxu0
  %809 = vmatprep.mubr.bf16.mxu0 0
  %810 = vmatmul.mubr.bf16.gmra.mrb[0].mxu0 %v583
  %v811 = vpop.f32.mrb[0].mxu0
  %v812 = vadd.f32 0.0, %v811
  %v813 = vpop.f32.mrb[0].mxu0
  %v814 = vpop.f32.mrb[0].mxu0
  %v815 = vadd.f32 0.0, %v814
  %v816 = vpop.f32.mrb[0].mxu0
  %817 = vmatprep.mubr.bf16.mxu0 0
  %818 = vmatmul.mubr.bf16.gmra.mrb[0].mxu0 %v586
  %v819 = vpop.f32.mrb[0].mxu0
  %v820 = vadd.f32 0.0, %v819
  %v821 = vpop.f32.mrb[0].mxu0
  %v822 = vpop.f32.mrb[0].mxu0
  %v823 = vadd.f32 0.0, %v822
  %v824 = vpop.f32.mrb[0].mxu0
  %825 = vmatprep.mubr.bf16.mxu0 0
  %826 = vmatmul.mubr.bf16.gmra.mrb[0].mxu0 %v589
  %v827 = vpop.f32.mrb[0].mxu0
  %v828 = vadd.f32 0.0, %v827
  %v829 = vpop.f32.mrb[0].mxu0
  %v830 = vpop.f32.mrb[0].mxu0
  %v831 = vadd.f32 0.0, %v830
  %v832 = vpop.f32.mrb[0].mxu0
  %833 = vmatprep.mubr.bf16.mxu0 0
  %834 = vmatmul.mubr.bf16.gmra.mrb[0].mxu0 %v592
  %v835 = vpop.f32.mrb[0].mxu0
  %v836 = vadd.f32 0.0, %v835
  %v837 = vpop.f32.mrb[0].mxu0
  %v838 = vpop.f32.mrb[0].mxu0
  %v839 = vadd.f32 0.0, %v838
  %v840 = vpop.f32.mrb[0].mxu0
  %841 = vmatprep.mubr.bf16.mxu0 0
  %842 = vmatmul.mubr.bf16.gmra.mrb[0].mxu0 %v595
  %v843 = vpop.f32.mrb[0].mxu0
  %v844 = vadd.f32 0.0, %v843
  %v845 = vpop.f32.mrb[0].mxu0
  %v846 = vpop.f32.mrb[0].mxu0
  %v847 = vadd.f32 0.0, %v846
  %v848 = vpop.f32.mrb[0].mxu0
  %849 = vmatprep.mubr.bf16.mxu0 0
  %850 = vmatmul.mubr.bf16.gmra.mrb[0].mxu0 %v598
  %v851 = vpop.f32.mrb[0].mxu0
  %v852 = vadd.f32 0.0, %v851
  %v853 = vpop.f32.mrb[0].mxu0
  %v854 = vpop.f32.mrb[0].mxu0
  %v855 = vadd.f32 0.0, %v854
  %v856 = vpop.f32.mrb[0].mxu0
  %857 = vmatprep.mubr.bf16.mxu0 0
  %858 = vmatmul.mubr.bf16.gmra.mrb[0].mxu0 %v601
  %v859 = vpop.f32.mrb[0].mxu0
  %v860 = vadd.f32 0.0, %v859
  %v861 = vpop.f32.mrb[0].mxu0
  %v862 = vpop.f32.mrb[0].mxu0
  %v863 = vadd.f32 0.0, %v862
  %v864 = vpop.f32.mrb[0].mxu0
  %865 = vmatprep.mubr.bf16.mxu0 0
  %866 = vmatmul.mubr.bf16.gmra.mrb[0].mxu0 %v604
  %v867 = vpop.f32.mrb[0].mxu0
  %v868 = vadd.f32 0.0, %v867
  %v869 = vpop.f32.mrb[0].mxu0
  %v870 = vpop.f32.mrb[0].mxu0
  %v871 = vadd.f32 0.0, %v870
  %v872 = vpop.f32.mrb[0].mxu0
  %873 = vmatprep.mubr.bf16.mxu0 0
  %874 = vmatmul.mubr.bf16.gmra.mrb[0].mxu0 %v607
  %v875 = vpop.f32.mrb[0].mxu0
  %v876 = vadd.f32 0.0, %v875
  %v877 = vpop.f32.mrb[0].mxu0
  %v878 = vpop.f32.mrb[0].mxu0
  %v879 = vadd.f32 0.0, %v878
  %v880 = vpop.f32.mrb[0].mxu0
  %881 = vmatprep.mubr.bf16.mxu0 0
  %882 = vmatmul.mubr.bf16.gmra.mrb[0].mxu0 %v610
  %v883 = vpop.f32.mrb[0].mxu0
  %v884 = vadd.f32 0.0, %v883
  %v885 = vpop.f32.mrb[0].mxu0
  %v886 = vpop.f32.mrb[0].mxu0
  %v887 = vadd.f32 0.0, %v886
  %v888 = vpop.f32.mrb[0].mxu0
  %889 = vmatprep.mubr.bf16.mxu0 0
  %890 = vmatmul.mubr.bf16.gmra.mrb[0].mxu0 %v613
  %v891 = vpop.f32.mrb[0].mxu0
  %v892 = vadd.f32 0.0, %v891
  %v893 = vpop.f32.mrb[0].mxu0
  %v894 = vpop.f32.mrb[0].mxu0
  %v895 = vadd.f32 0.0, %v894
  %v896 = vpop.f32.mrb[0].mxu0
  %897 = vmatprep.mubr.bf16.mxu0 0
  %898 = vmatmul.mubr.bf16.gmra.mrb[0].mxu0 %v616
  %v899 = vpop.f32.mrb[0].mxu0
  %v900 = vadd.f32 0.0, %v899
  %v901 = vpop.f32.mrb[0].mxu0
  %v902 = vpop.f32.mrb[0].mxu0
  %v903 = vadd.f32 0.0, %v902
  %v904 = vpop.f32.mrb[0].mxu0
  %905 = vmatprep.mubr.bf16.mxu0 0
  %906 = vmatmul.mubr.bf16.gmra.mrb[0].mxu0 %v619
  %v907 = vpop.f32.mrb[0].mxu0
  %v908 = vadd.f32 0.0, %v907
  %v909 = vpop.f32.mrb[0].mxu0
  %v910 = vpop.f32.mrb[0].mxu0
  %v911 = vadd.f32 0.0, %v910
  %v912 = vpop.f32.mrb[0].mxu0
  %913 = vdwg.mxu0
  %v914 = vadd.f32 %v459, %v660
  %v915 = vadd.f32 %v460, %v663
  %v916 = vadd.f32 %v461, %v668
  %v917 = vadd.f32 %v462, %v671
  %v918 = vadd.f32 %v463, %v676
  %v919 = vadd.f32 %v464, %v679
  %v920 = vadd.f32 %v465, %v684
  %v921 = vadd.f32 %v466, %v687
  %v922 = vadd.f32 %v467, %v692
  %v923 = vadd.f32 %v468, %v695
  %v924 = vadd.f32 %v469, %v700
  %v925 = vadd.f32 %v470, %v703
  %v926 = vadd.f32 %v471, %v708
  %v927 = vadd.f32 %v472, %v711
  %v928 = vadd.f32 %v473, %v716
  %v929 = vadd.f32 %v474, %v719
  %v930 = vadd.f32 %v475, %v724
  %v931 = vadd.f32 %v476, %v727
  %v932 = vadd.f32 %v477, %v732
  %v933 = vadd.f32 %v478, %v735
  %v934 = vadd.f32 %v479, %v740
  %v935 = vadd.f32 %v480, %v743
  %v936 = vadd.f32 %v481, %v748
  %v937 = vadd.f32 %v482, %v751
  %v938 = vadd.f32 %v483, %v756
  %v939 = vadd.f32 %v484, %v759
  %v940 = vadd.f32 %v485, %v764
  %v941 = vadd.f32 %v486, %v767
  %v942 = vadd.f32 %v487, %v772
  %v943 = vadd.f32 %v488, %v775
  %v944 = vadd.f32 %v489, %v780
  %v945 = vadd.f32 %v490, %v783
  %v946 = vadd.f32 %v491, %v788
  %v947 = vadd.f32 %v492, %v791
  %v948 = vadd.f32 %v493, %v796
  %v949 = vadd.f32 %v494, %v799
  %v950 = vadd.f32 %v495, %v804
  %v951 = vadd.f32 %v496, %v807
  %v952 = vadd.f32 %v497, %v812
  %v953 = vadd.f32 %v498, %v815
  %v954 = vadd.f32 %v499, %v820
  %v955 = vadd.f32 %v500, %v823
  %v956 = vadd.f32 %v501, %v828
  %v957 = vadd.f32 %v502, %v831
  %v958 = vadd.f32 %v503, %v836
  %v959 = vadd.f32 %v504, %v839
  %v960 = vadd.f32 %v505, %v844
  %v961 = vadd.f32 %v506, %v847
  %v962 = vadd.f32 %v507, %v852
  %v963 = vadd.f32 %v508, %v855
  %v964 = vadd.f32 %v509, %v860
  %v965 = vadd.f32 %v510, %v863
  %v966 = vadd.f32 %v511, %v868
  %v967 = vadd.f32 %v512, %v871
  %v968 = vadd.f32 %v513, %v876
  %v969 = vadd.f32 %v514, %v879
  %v970 = vadd.f32 %v515, %v884
  %v971 = vadd.f32 %v516, %v887
  %v972 = vadd.f32 %v517, %v892
  %v973 = vadd.f32 %v518, %v895
  %v974 = vadd.f32 %v519, %v900
  %v975 = vadd.f32 %v520, %v903
  %v976 = vadd.f32 %v521, %v908
  %v977 = vadd.f32 %v522, %v911
  %978 = vst.msk [vmem:[%s6] sm:$0xff] %vm524, %v914
  %979 = vst.msk [vmem:[%s6 + $0x8] sm:$0xff] %vm524, %v915
  %980 = vst.msk [vmem:[%s6 + $0x10] sm:$0xff] %vm524, %v916
  %981 = vst.msk [vmem:[%s6 + $0x18] sm:$0xff] %vm524, %v917
  %982 = vst.msk [vmem:[%s6 + $0x20] sm:$0xff] %vm524, %v918
  %983 = vst.msk [vmem:[%s6 + $0x28] sm:$0xff] %vm524, %v919
  %984 = vst.msk [vmem:[%s6 + $0x30] sm:$0xff] %vm524, %v920
  %985 = vst.msk [vmem:[%s6 + $0x38] sm:$0xff] %vm524, %v921
  %986 = vst.msk [vmem:[%s6 + $0x40] sm:$0xff] %vm524, %v922
  %987 = vst.msk [vmem:[%s6 + $0x48] sm:$0xff] %vm524, %v923
  %988 = vst.msk [vmem:[%s6 + $0x50] sm:$0xff] %vm524, %v924
  %989 = vst.msk [vmem:[%s6 + $0x58] sm:$0xff] %vm524, %v925
  %990 = vst.msk [vmem:[%s6 + $0x60] sm:$0xff] %vm524, %v926
  %991 = vst.msk [vmem:[%s6 + $0x68] sm:$0xff] %vm524, %v927
  %992 = vst.msk [vmem:[%s6 + $0x70] sm:$0xff] %vm524, %v928
  %993 = vst.msk [vmem:[%s6 + $0x78] sm:$0xff] %vm524, %v929
  %994 = vst.msk [vmem:[%s6 + $0x80] sm:$0xff] %vm524, %v930
  %995 = vst.msk [vmem:[%s6 + $0x88] sm:$0xff] %vm524, %v931
  %996 = vst.msk [vmem:[%s6 + $0x90] sm:$0xff] %vm524, %v932
  %997 = vst.msk [vmem:[%s6 + $0x98] sm:$0xff] %vm524, %v933
  %998 = vst.msk [vmem:[%s6 + $0xa0] sm:$0xff] %vm524, %v934
  %999 = vst.msk [vmem:[%s6 + $0xa8] sm:$0xff] %vm524, %v935
  %1000 = vst.msk [vmem:[%s6 + $0xb0] sm:$0xff] %vm524, %v936
  %1001 = vst.msk [vmem:[%s6 + $0xb8] sm:$0xff] %vm524, %v937
  %1002 = vst.msk [vmem:[%s6 + $0xc0] sm:$0xff] %vm524, %v938
  %1003 = vst.msk [vmem:[%s6 + $0xc8] sm:$0xff] %vm524, %v939
  %1004 = vst.msk [vmem:[%s6 + $0xd0] sm:$0xff] %vm524, %v940
  %1005 = vst.msk [vmem:[%s6 + $0xd8] sm:$0xff] %vm524, %v941
  %1006 = vst.msk [vmem:[%s6 + $0xe0] sm:$0xff] %vm524, %v942
  %1007 = vst.msk [vmem:[%s6 + $0xe8] sm:$0xff] %vm524, %v943
  %1008 = vst.msk [vmem:[%s6 + $0xf0] sm:$0xff] %vm524, %v944
  %1009 = vst.msk [vmem:[%s6 + $0xf8] sm:$0xff] %vm524, %v945
  %1010 = vst.msk [vmem:[%s6 + $0x100] sm:$0xff] %vm524, %v946
  %1011 = vst.msk [vmem:[%s6 + $0x108] sm:$0xff] %vm524, %v947
  %1012 = vst.msk [vmem:[%s6 + $0x110] sm:$0xff] %vm524, %v948
  %1013 = vst.msk [vmem:[%s6 + $0x118] sm:$0xff] %vm524, %v949
  %1014 = vst.msk [vmem:[%s6 + $0x120] sm:$0xff] %vm524, %v950
  %1015 = vst.msk [vmem:[%s6 + $0x128] sm:$0xff] %vm524, %v951
  %1016 = vst.msk [vmem:[%s6 + $0x130] sm:$0xff] %vm524, %v952
  %1017 = vst.msk [vmem:[%s6 + $0x138] sm:$0xff] %vm524, %v953
  %1018 = vst.msk [vmem:[%s6 + $0x140] sm:$0xff] %vm524, %v954
  %1019 = vst.msk [vmem:[%s6 + $0x148] sm:$0xff] %vm524, %v955
  %1020 = vst.msk [vmem:[%s6 + $0x150] sm:$0xff] %vm524, %v956
  %1021 = vst.msk [vmem:[%s6 + $0x158] sm:$0xff] %vm524, %v957
  %1022 = vst.msk [vmem:[%s6 + $0x160] sm:$0xff] %vm524, %v958
  %1023 = vst.msk [vmem:[%s6 + $0x168] sm:$0xff] %vm524, %v959
  %1024 = vst.msk [vmem:[%s6 + $0x170] sm:$0xff] %vm524, %v960
  %1025 = vst.msk [vmem:[%s6 + $0x178] sm:$0xff] %vm524, %v961
  %1026 = vst.msk [vmem:[%s6 + $0x180] sm:$0xff] %vm524, %v962
  %1027 = vst.msk [vmem:[%s6 + $0x188] sm:$0xff] %vm524, %v963
  %1028 = vst.msk [vmem:[%s6 + $0x190] sm:$0xff] %vm524, %v964
  %1029 = vst.msk [vmem:[%s6 + $0x198] sm:$0xff] %vm524, %v965
  %1030 = vst.msk [vmem:[%s6 + $0x1a0] sm:$0xff] %vm524, %v966
  %1031 = vst.msk [vmem:[%s6 + $0x1a8] sm:$0xff] %vm524, %v967
  %1032 = vst.msk [vmem:[%s6 + $0x1b0] sm:$0xff] %vm524, %v968
  %1033 = vst.msk [vmem:[%s6 + $0x1b8] sm:$0xff] %vm524, %v969
  %1034 = vst.msk [vmem:[%s6 + $0x1c0] sm:$0xff] %vm524, %v970
  %1035 = vst.msk [vmem:[%s6 + $0x1c8] sm:$0xff] %vm524, %v971
  %1036 = vst.msk [vmem:[%s6 + $0x1d0] sm:$0xff] %vm524, %v972
  %1037 = vst.msk [vmem:[%s6 + $0x1d8] sm:$0xff] %vm524, %v973
  %1038 = vst.msk [vmem:[%s6 + $0x1e0] sm:$0xff] %vm524, %v974
  %1039 = vst.msk [vmem:[%s6 + $0x1e8] sm:$0xff] %vm524, %v975
  %1040 = vst.msk [vmem:[%s6 + $0x1f0] sm:$0xff] %vm524, %v976
  %1041 = vst.msk [vmem:[%s6 + $0x1f8] sm:$0xff] %vm524, %v977
  // Predicated region
  $region30: #{residual_block_2dconv.3} parent=0 // pred_check
    %p1042 = pneg %p24
  $region31: #{residual_block_2dconv.3} parent=0 // pred_check_branch
    %1044 = sbr.rel (%p1042) target = $region33
  $region32: #{residual_block_2dconv.3} parent=0 // pred_region
    %v1045 = vld [vmem:[%s6] sm:$0xff]
    %v1046 = vld [vmem:[%s6 + $0x8] sm:$0xff]
    %v1047 = vld [vmem:[%s6 + $0x10] sm:$0xff]
    %v1048 = vld [vmem:[%s6 + $0x18] sm:$0xff]
    %v1049 = vld [vmem:[%s6 + $0x20] sm:$0xff]
    %v1050 = vld [vmem:[%s6 + $0x28] sm:$0xff]
    %v1051 = vld [vmem:[%s6 + $0x30] sm:$0xff]
    %v1052 = vld [vmem:[%s6 + $0x38] sm:$0xff]
    %v1053 = vld [vmem:[%s6 + $0x40] sm:$0xff]
    %v1054 = vld [vmem:[%s6 + $0x48] sm:$0xff]
    %v1055 = vld [vmem:[%s6 + $0x50] sm:$0xff]
    %v1056 = vld [vmem:[%s6 + $0x58] sm:$0xff]
    %v1057 = vld [vmem:[%s6 + $0x60] sm:$0xff]
    %v1058 = vld [vmem:[%s6 + $0x68] sm:$0xff]
    %v1059 = vld [vmem:[%s6 + $0x70] sm:$0xff]
    %v1060 = vld [vmem:[%s6 + $0x78] sm:$0xff]
    %v1061 = vld [vmem:[%s6 + $0x80] sm:$0xff]
    %v1062 = vld [vmem:[%s6 + $0x88] sm:$0xff]
    %v1063 = vld [vmem:[%s6 + $0x90] sm:$0xff]
    %v1064 = vld [vmem:[%s6 + $0x98] sm:$0xff]
    %v1065 = vld [vmem:[%s6 + $0xa0] sm:$0xff]
    %v1066 = vld [vmem:[%s6 + $0xa8] sm:$0xff]
    %v1067 = vld [vmem:[%s6 + $0xb0] sm:$0xff]
    %v1068 = vld [vmem:[%s6 + $0xb8] sm:$0xff]
    %v1069 = vld [vmem:[%s6 + $0xc0] sm:$0xff]
    %v1070 = vld [vmem:[%s6 + $0xc8] sm:$0xff]
    %v1071 = vld [vmem:[%s6 + $0xd0] sm:$0xff]
    %v1072 = vld [vmem:[%s6 + $0xd8] sm:$0xff]
    %v1073 = vld [vmem:[%s6 + $0xe0] sm:$0xff]
    %v1074 = vld [vmem:[%s6 + $0xe8] sm:$0xff]
    %v1075 = vld [vmem:[%s6 + $0xf0] sm:$0xff]
    %v1076 = vld [vmem:[%s6 + $0xf8] sm:$0xff]
    %v1077 = vld [vmem:[%s6 + $0x100] sm:$0xff]
    %v1078 = vld [vmem:[%s6 + $0x108] sm:$0xff]
    %v1079 = vld [vmem:[%s6 + $0x110] sm:$0xff]
    %v1080 = vld [vmem:[%s6 + $0x118] sm:$0xff]
    %v1081 = vld [vmem:[%s6 + $0x120] sm:$0xff]
    %v1082 = vld [vmem:[%s6 + $0x128] sm:$0xff]
    %v1083 = vld [vmem:[%s6 + $0x130] sm:$0xff]
    %v1084 = vld [vmem:[%s6 + $0x138] sm:$0xff]
    %v1085 = vld [vmem:[%s6 + $0x140] sm:$0xff]
    %v1086 = vld [vmem:[%s6 + $0x148] sm:$0xff]
    %v1087 = vld [vmem:[%s6 + $0x150] sm:$0xff]
    %v1088 = vld [vmem:[%s6 + $0x158] sm:$0xff]
    %v1089 = vld [vmem:[%s6 + $0x160] sm:$0xff]
    %v1090 = vld [vmem:[%s6 + $0x168] sm:$0xff]
    %v1091 = vld [vmem:[%s6 + $0x170] sm:$0xff]
    %v1092 = vld [vmem:[%s6 + $0x178] sm:$0xff]
    %v1093 = vld [vmem:[%s6 + $0x180] sm:$0xff]
    %v1094 = vld [vmem:[%s6 + $0x188] sm:$0xff]
    %v1095 = vld [vmem:[%s6 + $0x190] sm:$0xff]
    %v1096 = vld [vmem:[%s6 + $0x198] sm:$0xff]
    %v1097 = vld [vmem:[%s6 + $0x1a0] sm:$0xff]
    %v1098 = vld [vmem:[%s6 + $0x1a8] sm:$0xff]
    %v1099 = vld [vmem:[%s6 + $0x1b0] sm:$0xff]
    %v1100 = vld [vmem:[%s6 + $0x1b8] sm:$0xff]
    %v1101 = vld [vmem:[%s6 + $0x1c0] sm:$0xff]
    %v1102 = vld [vmem:[%s6 + $0x1c8] sm:$0xff]
    %v1103 = vld [vmem:[%s6 + $0x1d0] sm:$0xff]
    %v1104 = vld [vmem:[%s6 + $0x1d8] sm:$0xff]
    %v1105 = vld [vmem:[%s6 + $0x1e0] sm:$0xff]
    %v1106 = vld [vmem:[%s6 + $0x1e8] sm:$0xff]
    %v1107 = vld [vmem:[%s6 + $0x1f0] sm:$0xff]
    %v1108 = vld [vmem:[%s6 + $0x1f8] sm:$0xff]
    %v1109 = vld [vmem:[%s4] sm:$0x1]
    %v1111 = vlaneseq
    %v1112 = vshrl.u32 %v1111, 7
    %v1113 = vsub.s32 0, %v1112
    %v1114 = vrot.slane %v1109, %v1113
    %v1116 = vmul.f32 %v1045, %v1114
    %v1117 = vmul.f32 %v1046, %v1114
    %v1118 = vmul.f32 %v1047, %v1114
    %v1119 = vmul.f32 %v1048, %v1114
    %v1120 = vmul.f32 %v1049, %v1114
    %v1121 = vmul.f32 %v1050, %v1114
    %v1122 = vmul.f32 %v1051, %v1114
    %v1123 = vmul.f32 %v1052, %v1114
    %v1124 = vmul.f32 %v1053, %v1114
    %v1125 = vmul.f32 %v1054, %v1114
    %v1126 = vmul.f32 %v1055, %v1114
    %v1127 = vmul.f32 %v1056, %v1114
    %v1128 = vmul.f32 %v1057, %v1114
    %v1129 = vmul.f32 %v1058, %v1114
    %v1130 = vmul.f32 %v1059, %v1114
    %v1131 = vmul.f32 %v1060, %v1114
    %v1132 = vmul.f32 %v1061, %v1114
    %v1133 = vmul.f32 %v1062, %v1114
    %v1134 = vmul.f32 %v1063, %v1114
    %v1135 = vmul.f32 %v1064, %v1114
    %v1136 = vmul.f32 %v1065, %v1114
    %v1137 = vmul.f32 %v1066, %v1114
    %v1138 = vmul.f32 %v1067, %v1114
    %v1139 = vmul.f32 %v1068, %v1114
    %v1140 = vmul.f32 %v1069, %v1114
    %v1141 = vmul.f32 %v1070, %v1114
    %v1142 = vmul.f32 %v1071, %v1114
    %v1143 = vmul.f32 %v1072, %v1114
    %v1144 = vmul.f32 %v1073, %v1114
    %v1145 = vmul.f32 %v1074, %v1114
    %v1146 = vmul.f32 %v1075, %v1114
    %v1147 = vmul.f32 %v1076, %v1114
    %v1148 = vmul.f32 %v1077, %v1114
    %v1149 = vmul.f32 %v1078, %v1114
    %v1150 = vmul.f32 %v1079, %v1114
    %v1151 = vmul.f32 %v1080, %v1114
    %v1152 = vmul.f32 %v1081, %v1114
    %v1153 = vmul.f32 %v1082, %v1114
    %v1154 = vmul.f32 %v1083, %v1114
    %v1155 = vmul.f32 %v1084, %v1114
    %v1156 = vmul.f32 %v1085, %v1114
    %v1157 = vmul.f32 %v1086, %v1114
    %v1158 = vmul.f32 %v1087, %v1114
    %v1159 = vmul.f32 %v1088, %v1114
    %v1160 = vmul.f32 %v1089, %v1114
    %v1161 = vmul.f32 %v1090, %v1114
    %v1162 = vmul.f32 %v1091, %v1114
    %v1163 = vmul.f32 %v1092, %v1114
    %v1164 = vmul.f32 %v1093, %v1114
    %v1165 = vmul.f32 %v1094, %v1114
    %v1166 = vmul.f32 %v1095, %v1114
    %v1167 = vmul.f32 %v1096, %v1114
    %v1168 = vmul.f32 %v1097, %v1114
    %v1169 = vmul.f32 %v1098, %v1114
    %v1170 = vmul.f32 %v1099, %v1114
    %v1171 = vmul.f32 %v1100, %v1114
    %v1172 = vmul.f32 %v1101, %v1114
    %v1173 = vmul.f32 %v1102, %v1114
    %v1174 = vmul.f32 %v1103, %v1114
    %v1175 = vmul.f32 %v1104, %v1114
    %v1176 = vmul.f32 %v1105, %v1114
    %v1177 = vmul.f32 %v1106, %v1114
    %v1178 = vmul.f32 %v1107, %v1114
    %v1179 = vmul.f32 %v1108, %v1114
    %v1180 = vld [vmem:[%s5] sm:$0x1]
    %v1182 = vlaneseq
    %v1183 = vshrl.u32 %v1182, 7
    %v1184 = vsub.s32 0, %v1183
    %v1185 = vrot.slane %v1180, %v1184
    %v1187 = vadd.f32 %v1116, %v1185
    %v1188 = vadd.f32 %v1117, %v1185
    %v1189 = vadd.f32 %v1118, %v1185
    %v1190 = vadd.f32 %v1119, %v1185
    %v1191 = vadd.f32 %v1120, %v1185
    %v1192 = vadd.f32 %v1121, %v1185
    %v1193 = vadd.f32 %v1122, %v1185
    %v1194 = vadd.f32 %v1123, %v1185
    %v1195 = vadd.f32 %v1124, %v1185
    %v1196 = vadd.f32 %v1125, %v1185
    %v1197 = vadd.f32 %v1126, %v1185
    %v1198 = vadd.f32 %v1127, %v1185
    %v1199 = vadd.f32 %v1128, %v1185
    %v1200 = vadd.f32 %v1129, %v1185
    %v1201 = vadd.f32 %v1130, %v1185
    %v1202 = vadd.f32 %v1131, %v1185
    %v1203 = vadd.f32 %v1132, %v1185
    %v1204 = vadd.f32 %v1133, %v1185
    %v1205 = vadd.f32 %v1134, %v1185
    %v1206 = vadd.f32 %v1135, %v1185
    %v1207 = vadd.f32 %v1136, %v1185
    %v1208 = vadd.f32 %v1137, %v1185
    %v1209 = vadd.f32 %v1138, %v1185
    %v1210 = vadd.f32 %v1139, %v1185
    %v1211 = vadd.f32 %v1140, %v1185
    %v1212 = vadd.f32 %v1141, %v1185
    %v1213 = vadd.f32 %v1142, %v1185
    %v1214 = vadd.f32 %v1143, %v1185
    %v1215 = vadd.f32 %v1144, %v1185
    %v1216 = vadd.f32 %v1145, %v1185
    %v1217 = vadd.f32 %v1146, %v1185
    %v1218 = vadd.f32 %v1147, %v1185
    %v1219 = vadd.f32 %v1148, %v1185
    %v1220 = vadd.f32 %v1149, %v1185
    %v1221 = vadd.f32 %v1150, %v1185
    %v1222 = vadd.f32 %v1151, %v1185
    %v1223 = vadd.f32 %v1152, %v1185
    %v1224 = vadd.f32 %v1153, %v1185
    %v1225 = vadd.f32 %v1154, %v1185
    %v1226 = vadd.f32 %v1155, %v1185
    %v1227 = vadd.f32 %v1156, %v1185
    %v1228 = vadd.f32 %v1157, %v1185
    %v1229 = vadd.f32 %v1158, %v1185
    %v1230 = vadd.f32 %v1159, %v1185
    %v1231 = vadd.f32 %v1160, %v1185
    %v1232 = vadd.f32 %v1161, %v1185
    %v1233 = vadd.f32 %v1162, %v1185
    %v1234 = vadd.f32 %v1163, %v1185
    %v1235 = vadd.f32 %v1164, %v1185
    %v1236 = vadd.f32 %v1165, %v1185
    %v1237 = vadd.f32 %v1166, %v1185
    %v1238 = vadd.f32 %v1167, %v1185
    %v1239 = vadd.f32 %v1168, %v1185
    %v1240 = vadd.f32 %v1169, %v1185
    %v1241 = vadd.f32 %v1170, %v1185
    %v1242 = vadd.f32 %v1171, %v1185
    %v1243 = vadd.f32 %v1172, %v1185
    %v1244 = vadd.f32 %v1173, %v1185
    %v1245 = vadd.f32 %v1174, %v1185
    %v1246 = vadd.f32 %v1175, %v1185
    %v1247 = vadd.f32 %v1176, %v1185
    %v1248 = vadd.f32 %v1177, %v1185
    %v1249 = vadd.f32 %v1178, %v1185
    %v1250 = vadd.f32 %v1179, %v1185
    %v1251 = vmax.f32 %v1187, 0.0
    %v1252 = vmax.f32 %v1188, 0.0
    %v1253 = vmax.f32 %v1189, 0.0
    %v1254 = vmax.f32 %v1190, 0.0
    %v1255 = vmax.f32 %v1191, 0.0
    %v1256 = vmax.f32 %v1192, 0.0
    %v1257 = vmax.f32 %v1193, 0.0
    %v1258 = vmax.f32 %v1194, 0.0
    %v1259 = vmax.f32 %v1195, 0.0
    %v1260 = vmax.f32 %v1196, 0.0
    %v1261 = vmax.f32 %v1197, 0.0
    %v1262 = vmax.f32 %v1198, 0.0
    %v1263 = vmax.f32 %v1199, 0.0
    %v1264 = vmax.f32 %v1200, 0.0
    %v1265 = vmax.f32 %v1201, 0.0
    %v1266 = vmax.f32 %v1202, 0.0
    %v1267 = vmax.f32 %v1203, 0.0
    %v1268 = vmax.f32 %v1204, 0.0
    %v1269 = vmax.f32 %v1205, 0.0
    %v1270 = vmax.f32 %v1206, 0.0
    %v1271 = vmax.f32 %v1207, 0.0
    %v1272 = vmax.f32 %v1208, 0.0
    %v1273 = vmax.f32 %v1209, 0.0
    %v1274 = vmax.f32 %v1210, 0.0
    %v1275 = vmax.f32 %v1211, 0.0
    %v1276 = vmax.f32 %v1212, 0.0
    %v1277 = vmax.f32 %v1213, 0.0
    %v1278 = vmax.f32 %v1214, 0.0
    %v1279 = vmax.f32 %v1215, 0.0
    %v1280 = vmax.f32 %v1216, 0.0
    %v1281 = vmax.f32 %v1217, 0.0
    %v1282 = vmax.f32 %v1218, 0.0
    %v1283 = vmax.f32 %v1219, 0.0
    %v1284 = vmax.f32 %v1220, 0.0
    %v1285 = vmax.f32 %v1221, 0.0
    %v1286 = vmax.f32 %v1222, 0.0
    %v1287 = vmax.f32 %v1223, 0.0
    %v1288 = vmax.f32 %v1224, 0.0
    %v1289 = vmax.f32 %v1225, 0.0
    %v1290 = vmax.f32 %v1226, 0.0
    %v1291 = vmax.f32 %v1227, 0.0
    %v1292 = vmax.f32 %v1228, 0.0
    %v1293 = vmax.f32 %v1229, 0.0
    %v1294 = vmax.f32 %v1230, 0.0
    %v1295 = vmax.f32 %v1231, 0.0
    %v1296 = vmax.f32 %v1232, 0.0
    %v1297 = vmax.f32 %v1233, 0.0
    %v1298 = vmax.f32 %v1234, 0.0
    %v1299 = vmax.f32 %v1235, 0.0
    %v1300 = vmax.f32 %v1236, 0.0
    %v1301 = vmax.f32 %v1237, 0.0
    %v1302 = vmax.f32 %v1238, 0.0
    %v1303 = vmax.f32 %v1239, 0.0
    %v1304 = vmax.f32 %v1240, 0.0
    %v1305 = vmax.f32 %v1241, 0.0
    %v1306 = vmax.f32 %v1242, 0.0
    %v1307 = vmax.f32 %v1243, 0.0
    %v1308 = vmax.f32 %v1244, 0.0
    %v1309 = vmax.f32 %v1245, 0.0
    %v1310 = vmax.f32 %v1246, 0.0
    %v1311 = vmax.f32 %v1247, 0.0
    %v1312 = vmax.f32 %v1248, 0.0
    %v1313 = vmax.f32 %v1249, 0.0
    %v1314 = vmax.f32 %v1250, 0.0
    %1315 = vst.msk [vmem:[%s6] sm:$0xff] %vm524, %v1251
    %1316 = vst.msk [vmem:[%s6 + $0x8] sm:$0xff] %vm524, %v1252
    %1317 = vst.msk [vmem:[%s6 + $0x10] sm:$0xff] %vm524, %v1253
    %1318 = vst.msk [vmem:[%s6 + $0x18] sm:$0xff] %vm524, %v1254
    %1319 = vst.msk [vmem:[%s6 + $0x20] sm:$0xff] %vm524, %v1255
    %1320 = vst.msk [vmem:[%s6 + $0x28] sm:$0xff] %vm524, %v1256
    %1321 = vst.msk [vmem:[%s6 + $0x30] sm:$0xff] %vm524, %v1257
    %1322 = vst.msk [vmem:[%s6 + $0x38] sm:$0xff] %vm524, %v1258
    %1323 = vst.msk [vmem:[%s6 + $0x40] sm:$0xff] %vm524, %v1259
    %1324 = vst.msk [vmem:[%s6 + $0x48] sm:$0xff] %vm524, %v1260
    %1325 = vst.msk [vmem:[%s6 + $0x50] sm:$0xff] %vm524, %v1261
    %1326 = vst.msk [vmem:[%s6 + $0x58] sm:$0xff] %vm524, %v1262
    %1327 = vst.msk [vmem:[%s6 + $0x60] sm:$0xff] %vm524, %v1263
    %1328 = vst.msk [vmem:[%s6 + $0x68] sm:$0xff] %vm524, %v1264
    %1329 = vst.msk [vmem:[%s6 + $0x70] sm:$0xff] %vm524, %v1265
    %1330 = vst.msk [vmem:[%s6 + $0x78] sm:$0xff] %vm524, %v1266
    %1331 = vst.msk [vmem:[%s6 + $0x80] sm:$0xff] %vm524, %v1267
    %1332 = vst.msk [vmem:[%s6 + $0x88] sm:$0xff] %vm524, %v1268
    %1333 = vst.msk [vmem:[%s6 + $0x90] sm:$0xff] %vm524, %v1269
    %1334 = vst.msk [vmem:[%s6 + $0x98] sm:$0xff] %vm524, %v1270
    %1335 = vst.msk [vmem:[%s6 + $0xa0] sm:$0xff] %vm524, %v1271
    %1336 = vst.msk [vmem:[%s6 + $0xa8] sm:$0xff] %vm524, %v1272
    %1337 = vst.msk [vmem:[%s6 + $0xb0] sm:$0xff] %vm524, %v1273
    %1338 = vst.msk [vmem:[%s6 + $0xb8] sm:$0xff] %vm524, %v1274
    %1339 = vst.msk [vmem:[%s6 + $0xc0] sm:$0xff] %vm524, %v1275
    %1340 = vst.msk [vmem:[%s6 + $0xc8] sm:$0xff] %vm524, %v1276
    %1341 = vst.msk [vmem:[%s6 + $0xd0] sm:$0xff] %vm524, %v1277
    %1342 = vst.msk [vmem:[%s6 + $0xd8] sm:$0xff] %vm524, %v1278
    %1343 = vst.msk [vmem:[%s6 + $0xe0] sm:$0xff] %vm524, %v1279
    %1344 = vst.msk [vmem:[%s6 + $0xe8] sm:$0xff] %vm524, %v1280
    %1345 = vst.msk [vmem:[%s6 + $0xf0] sm:$0xff] %vm524, %v1281
    %1346 = vst.msk [vmem:[%s6 + $0xf8] sm:$0xff] %vm524, %v1282
    %1347 = vst.msk [vmem:[%s6 + $0x100] sm:$0xff] %vm524, %v1283
    %1348 = vst.msk [vmem:[%s6 + $0x108] sm:$0xff] %vm524, %v1284
    %1349 = vst.msk [vmem:[%s6 + $0x110] sm:$0xff] %vm524, %v1285
    %1350 = vst.msk [vmem:[%s6 + $0x118] sm:$0xff] %vm524, %v1286
    %1351 = vst.msk [vmem:[%s6 + $0x120] sm:$0xff] %vm524, %v1287
    %1352 = vst.msk [vmem:[%s6 + $0x128] sm:$0xff] %vm524, %v1288
    %1353 = vst.msk [vmem:[%s6 + $0x130] sm:$0xff] %vm524, %v1289
    %1354 = vst.msk [vmem:[%s6 + $0x138] sm:$0xff] %vm524, %v1290
    %1355 = vst.msk [vmem:[%s6 + $0x140] sm:$0xff] %vm524, %v1291
    %1356 = vst.msk [vmem:[%s6 + $0x148] sm:$0xff] %vm524, %v1292
    %1357 = vst.msk [vmem:[%s6 + $0x150] sm:$0xff] %vm524, %v1293
    %1358 = vst.msk [vmem:[%s6 + $0x158] sm:$0xff] %vm524, %v1294
    %1359 = vst.msk [vmem:[%s6 + $0x160] sm:$0xff] %vm524, %v1295
    %1360 = vst.msk [vmem:[%s6 + $0x168] sm:$0xff] %vm524, %v1296
    %1361 = vst.msk [vmem:[%s6 + $0x170] sm:$0xff] %vm524, %v1297
    %1362 = vst.msk [vmem:[%s6 + $0x178] sm:$0xff] %vm524, %v1298
    %1363 = vst.msk [vmem:[%s6 + $0x180] sm:$0xff] %vm524, %v1299
    %1364 = vst.msk [vmem:[%s6 + $0x188] sm:$0xff] %vm524, %v1300
    %1365 = vst.msk [vmem:[%s6 + $0x190] sm:$0xff] %vm524, %v1301
    %1366 = vst.msk [vmem:[%s6 + $0x198] sm:$0xff] %vm524, %v1302
    %1367 = vst.msk [vmem:[%s6 + $0x1a0] sm:$0xff] %vm524, %v1303
    %1368 = vst.msk [vmem:[%s6 + $0x1a8] sm:$0xff] %vm524, %v1304
    %1369 = vst.msk [vmem:[%s6 + $0x1b0] sm:$0xff] %vm524, %v1305
    %1370 = vst.msk [vmem:[%s6 + $0x1b8] sm:$0xff] %vm524, %v1306
    %1371 = vst.msk [vmem:[%s6 + $0x1c0] sm:$0xff] %vm524, %v1307
    %1372 = vst.msk [vmem:[%s6 + $0x1c8] sm:$0xff] %vm524, %v1308
    %1373 = vst.msk [vmem:[%s6 + $0x1d0] sm:$0xff] %vm524, %v1309
    %1374 = vst.msk [vmem:[%s6 + $0x1d8] sm:$0xff] %vm524, %v1310
    %1375 = vst.msk [vmem:[%s6 + $0x1e0] sm:$0xff] %vm524, %v1311
    %1376 = vst.msk [vmem:[%s6 + $0x1e8] sm:$0xff] %vm524, %v1312
    %1377 = vst.msk [vmem:[%s6 + $0x1f0] sm:$0xff] %vm524, %v1313
    %1378 = vst.msk [vmem:[%s6 + $0x1f8] sm:$0xff] %vm524, %v1314
  $region33: #{residual_block_2dconv.3} parent=0 // pred_fallthru
    _
  // Predicated region
  $region34: #{residual_block_2dconv.3} parent=0 // pred_check
    _
  $region35: #{residual_block_2dconv.3} parent=0 // pred_check_branch
    %1380 = sbr.rel (0) target = $region37
  $region36: #{residual_block_2dconv.3} parent=0 // pred_region
    _
  $region37: #{residual_block_2dconv.3} parent=0 // pred_fallthru
    _
  // Predicated region
  $region38: #{residual_block_2dconv.3} parent=0 // pred_check
    _
  $region39: #{residual_block_2dconv.3} parent=0 // pred_check_branch
    %1382 = sbr.rel (0) target = $region41
  $region40: #{residual_block_2dconv.3} parent=0 // pred_region
    _
  $region41: #{residual_block_2dconv.3} parent=0 // pred_fallthru
    _

// kernel: residual_block_2dconv.4
$region0: #{residual_block_2dconv.4}
  #allocation0 [shape = 'u32[]', space=smem, size = 0x4, offset = 0x4, fixed_abs, tag = 'smem constant byte address 0x4 - core index']
  #allocation1 [shape = 'u32[144,128]{1,0:T(1,128)}', space=vmem, size = 0x12000, scoped, tag = 'internal scratch']
  %s0 = inlined_call_operand.vmem [shape: bf16[128,64], index: 0, kind: input, shape index: {}]
  %s1 = inlined_call_operand.vmem [shape: bf16[64,8], index: 1, kind: input, shape index: {}]
  %s2 = inlined_call_operand.vmem [shape: f32[1,8], index: 2, kind: input, shape index: {}]
  %s3 = inlined_call_operand.vmem [shape: f32[1,8], index: 3, kind: input, shape index: {}]
  %s4 = inlined_call_operand.vmem [shape: f32[1,8], index: 4, kind: input, shape index: {}]
  %s5 = inlined_call_operand.vmem [shape: f32[128,8], index: 5, kind: output, shape index: {}]
  %s6 = sld [smem:[#allocation0]]
  $region38: #{residual_block_2dconv.4} parent=0
    _
  %s8 = ssub.s32 1, %s6
  %s9 = scalar_select 0, %s8, %s6
  // Predicated region
  $region2: #{residual_block_2dconv.4} parent=0 // pred_check
    _
  $region3: #{residual_block_2dconv.4} parent=0 // pred_check_branch
    %11 = sbr.rel (0) target = $region5
  $region4: #{residual_block_2dconv.4} parent=0 // pred_region
    _
  $region5: #{residual_block_2dconv.4} parent=0 // pred_fallthru
    _
  // Predicated region
  $region6: #{residual_block_2dconv.4} parent=0 // pred_check
    _
  $region7: #{residual_block_2dconv.4} parent=0 // pred_check_branch
    %13 = sbr.rel (0) target = $region9
  $region8: #{residual_block_2dconv.4} parent=0 // pred_region
    _
  $region9: #{residual_block_2dconv.4} parent=0 // pred_fallthru
    _
  // Predicated region
  $region10: #{residual_block_2dconv.4} parent=0 // pred_check
    _
  $region11: #{residual_block_2dconv.4} parent=0 // pred_check_branch
    %15 = sbr.rel (0) target = $region13
  $region12: #{residual_block_2dconv.4} parent=0 // pred_region
    _
  $region13: #{residual_block_2dconv.4} parent=0 // pred_fallthru
    _
  // Predicated region
  $region14: #{residual_block_2dconv.4} parent=0 // pred_check
    _
  $region15: #{residual_block_2dconv.4} parent=0 // pred_check_branch
    %17 = sbr.rel (0) target = $region17
  $region16: #{residual_block_2dconv.4} parent=0 // pred_region
    _
  $region17: #{residual_block_2dconv.4} parent=0 // pred_fallthru
    _
  // Predicated region
  $region18: #{residual_block_2dconv.4} parent=0 // pred_check
    _
  $region19: #{residual_block_2dconv.4} parent=0 // pred_check_branch
    %19 = sbr.rel (0) target = $region21
  $region20: #{residual_block_2dconv.4} parent=0 // pred_region
    _
  $region21: #{residual_block_2dconv.4} parent=0 // pred_fallthru
    _
  %p21 = scmp.eq.s32.totalorder 0, 0
  // Predicated region
  $region22: #{residual_block_2dconv.4} parent=0 // pred_check
    %p22 = pneg %p21
  $region23: #{residual_block_2dconv.4} parent=0 // pred_check_branch
    %24 = sbr.rel (%p22) target = $region25
  $region24: #{residual_block_2dconv.4} parent=0 // pred_region
    %vm25 = vcmask 64512
    %26 = vst.msk [vmem:[%s5] sm:$0xff] %vm25, 0.0
    %27 = vst.msk [vmem:[%s5 + $0x8] sm:$0xff] %vm25, 0.0
    %28 = vst.msk [vmem:[%s5 + $0x10] sm:$0xff] %vm25, 0.0
    %29 = vst.msk [vmem:[%s5 + $0x18] sm:$0xff] %vm25, 0.0
    %30 = vst.msk [vmem:[%s5 + $0x20] sm:$0xff] %vm25, 0.0
    %31 = vst.msk [vmem:[%s5 + $0x28] sm:$0xff] %vm25, 0.0
    %32 = vst.msk [vmem:[%s5 + $0x30] sm:$0xff] %vm25, 0.0
    %33 = vst.msk [vmem:[%s5 + $0x38] sm:$0xff] %vm25, 0.0
    %34 = vst.msk [vmem:[%s5 + $0x40] sm:$0xff] %vm25, 0.0
    %35 = vst.msk [vmem:[%s5 + $0x48] sm:$0xff] %vm25, 0.0
    %36 = vst.msk [vmem:[%s5 + $0x50] sm:$0xff] %vm25, 0.0
    %37 = vst.msk [vmem:[%s5 + $0x58] sm:$0xff] %vm25, 0.0
    %38 = vst.msk [vmem:[%s5 + $0x60] sm:$0xff] %vm25, 0.0
    %39 = vst.msk [vmem:[%s5 + $0x68] sm:$0xff] %vm25, 0.0
    %40 = vst.msk [vmem:[%s5 + $0x70] sm:$0xff] %vm25, 0.0
    %41 = vst.msk [vmem:[%s5 + $0x78] sm:$0xff] %vm25, 0.0
  $region25: #{residual_block_2dconv.4} parent=0 // pred_fallthru
    _
  %v42 = vld [vmem:[%s5] sm:$0xff]
  %v43 = vld [vmem:[%s5 + $0x8] sm:$0xff]
  %v44 = vld [vmem:[%s5 + $0x10] sm:$0xff]
  %v45 = vld [vmem:[%s5 + $0x18] sm:$0xff]
  %v46 = vld [vmem:[%s5 + $0x20] sm:$0xff]
  %v47 = vld [vmem:[%s5 + $0x28] sm:$0xff]
  %v48 = vld [vmem:[%s5 + $0x30] sm:$0xff]
  %v49 = vld [vmem:[%s5 + $0x38] sm:$0xff]
  %v50 = vld [vmem:[%s5 + $0x40] sm:$0xff]
  %v51 = vld [vmem:[%s5 + $0x48] sm:$0xff]
  %v52 = vld [vmem:[%s5 + $0x50] sm:$0xff]
  %v53 = vld [vmem:[%s5 + $0x58] sm:$0xff]
  %v54 = vld [vmem:[%s5 + $0x60] sm:$0xff]
  %v55 = vld [vmem:[%s5 + $0x68] sm:$0xff]
  %v56 = vld [vmem:[%s5 + $0x70] sm:$0xff]
  %v57 = vld [vmem:[%s5 + $0x78] sm:$0xff]
  %v58 = vld [vmem:[%s0] sm:$0xf]
  %v59 = vld [vmem:[%s0 + $0x4] sm:$0xf]
  %v60 = vld [vmem:[%s0 + $0x8] sm:$0xf]
  %v61 = vld [vmem:[%s0 + $0xc] sm:$0xf]
  %v62 = vld [vmem:[%s0 + $0x10] sm:$0xf]
  %v63 = vld [vmem:[%s0 + $0x14] sm:$0xf]
  %v64 = vld [vmem:[%s0 + $0x18] sm:$0xf]
  %v65 = vld [vmem:[%s0 + $0x1c] sm:$0xf]
  %v66 = vld [vmem:[%s0 + $0x20] sm:$0xf]
  %v67 = vld [vmem:[%s0 + $0x24] sm:$0xf]
  %v68 = vld [vmem:[%s0 + $0x28] sm:$0xf]
  %v69 = vld [vmem:[%s0 + $0x2c] sm:$0xf]
  %v70 = vld [vmem:[%s0 + $0x30] sm:$0xf]
  %v71 = vld [vmem:[%s0 + $0x34] sm:$0xf]
  %v72 = vld [vmem:[%s0 + $0x38] sm:$0xf]
  %v73 = vld [vmem:[%s0 + $0x3c] sm:$0xf]
  %v74 = vld [vmem:[%s1] sm:$0xf]
  %v75 = vld [vmem:[%s1 + $0x4] sm:$0xf]
  %v76 = vld [vmem:[%s1 + $0x8] sm:$0xf]
  %v77 = vld [vmem:[%s1 + $0xc] sm:$0xf]
  %v78 = vld [vmem:[%s1 + $0x10] sm:$0xf]
  %v79 = vld [vmem:[%s1 + $0x14] sm:$0xf]
  %v80 = vld [vmem:[%s1 + $0x18] sm:$0xf]
  %v81 = vld [vmem:[%s1 + $0x1c] sm:$0xf]
  %v98 = vunpack.c.l.b16 %v58
  %v99 = vunpack.c.l.b16 %v59
  %v100 = vunpack.c.l.b16 %v60
  %v101 = vunpack.c.l.b16 %v61
  %v102 = vunpack.c.l.b16 %v62
  %v103 = vunpack.c.l.b16 %v63
  %v104 = vunpack.c.l.b16 %v64
  %v105 = vunpack.c.l.b16 %v65
  %v106 = vunpack.c.l.b16 %v66
  %v107 = vunpack.c.l.b16 %v67
  %v108 = vunpack.c.l.b16 %v68
  %v109 = vunpack.c.l.b16 %v69
  %v110 = vunpack.c.l.b16 %v70
  %v111 = vunpack.c.l.b16 %v71
  %v112 = vunpack.c.l.b16 %v72
  %v113 = vunpack.c.l.b16 %v73
  %v114 = vpack.c.b16 %v99, %v98
  %v115 = vpack.c.b16 %v101, %v100
  %v116 = vpack.c.b16 %v103, %v102
  %v117 = vpack.c.b16 %v105, %v104
  %v118 = vpack.c.b16 %v107, %v106
  %v119 = vpack.c.b16 %v109, %v108
  %v120 = vpack.c.b16 %v111, %v110
  %v121 = vpack.c.b16 %v113, %v112
  %v130 = vunpack.c.l.b16 %v74
  %v131 = vunpack.c.l.b16 %v75
  %v132 = vunpack.c.l.b16 %v76
  %v133 = vunpack.c.l.b16 %v77
  %v134 = vunpack.c.l.b16 %v78
  %v135 = vunpack.c.l.b16 %v79
  %v136 = vunpack.c.l.b16 %v80
  %v137 = vunpack.c.l.b16 %v81
  %v138 = vpack.c.b16 %v131, %v130
  %v139 = vpack.c.b16 %v133, %v132
  %v140 = vpack.c.b16 %v135, %v134
  %v141 = vpack.c.b16 %v137, %v136
  %vm146 = vcmask 523264
  %v148 = vsel %vm146, %v114, 0
  %v151 = vsel %vm146, %v115, 0
  %v154 = vsel %vm146, %v116, 0
  %v157 = vsel %vm146, %v117, 0
  %v160 = vsel %vm146, %v118, 0
  %v163 = vsel %vm146, %v119, 0
  %v166 = vsel %vm146, %v120, 0
  %v169 = vsel %vm146, %v121, 0
  %171 = vmatprep.subr.bf16.mxu0 0
  %172 = vmatpush1.bf16.msra.mxu0 %v138
  %173 = vmatprep.subr.bf16.mxu0 0
  %174 = vmatpush1.bf16.msra.mxu0 %v139
  %175 = vmatprep.subr.bf16.mxu0 0
  %176 = vmatpush1.bf16.msra.mxu0 %v140
  %177 = vmatprep.subr.bf16.mxu0 0
  %178 = vmatpush1.bf16.msra.mxu0 %v141
  %179 = vmatprep.subr.bf16.mxu0 0
  %180 = vmatpush1.bf16.msra.mxu0 0
  %181 = vmatprep.subr.bf16.mxu0 0
  %182 = vmatpush1.bf16.msra.mxu0 0
  %183 = vmatprep.subr.bf16.mxu0 0
  %184 = vmatpush1.bf16.msra.mxu0 0
  %185 = vmatprep.subr.bf16.mxu0 0
  %186 = vmatpush1.bf16.msra.mxu0 0
  %187 = vmatprep.subr.bf16.mxu0 0
  %188 = vmatpush1.bf16.msra.mxu0 0
  %189 = vmatprep.subr.bf16.mxu0 0
  %190 = vmatpush1.bf16.msra.mxu0 0
  %191 = vmatprep.subr.bf16.mxu0 0
  %192 = vmatpush1.bf16.msra.mxu0 0
  %193 = vmatprep.subr.bf16.mxu0 0
  %194 = vmatpush1.bf16.msra.mxu0 0
  %195 = vmatprep.subr.bf16.mxu0 0
  %196 = vmatpush1.bf16.msra.mxu0 0
  %197 = vmatprep.subr.bf16.mxu0 0
  %198 = vmatpush1.bf16.msra.mxu0 0
  %199 = vmatprep.subr.bf16.mxu0 0
  %200 = vmatpush1.bf16.msra.mxu0 0
  %201 = vmatprep.subr.bf16.mxu0 0
  %202 = vmatpush1.bf16.msra.mxu0 0
  %203 = vmatprep.mubr.bf16.mxu0 0
  %204 = vmatmul.mubr.bf16.gmra.mrb[0].mxu0 %v148
  %v205 = vpop.f32.mrb[0].mxu0
  %v206 = vadd.f32 0.0, %v205
  %v207 = vpop.f32.mrb[0].mxu0
  %v208 = vpop.f32.mrb[0].mxu0
  %v209 = vadd.f32 0.0, %v208
  %v210 = vpop.f32.mrb[0].mxu0
  %211 = vmatprep.mubr.bf16.mxu0 0
  %212 = vmatmul.mubr.bf16.gmra.mrb[0].mxu0 %v151
  %v213 = vpop.f32.mrb[0].mxu0
  %v214 = vadd.f32 0.0, %v213
  %v215 = vpop.f32.mrb[0].mxu0
  %v216 = vpop.f32.mrb[0].mxu0
  %v217 = vadd.f32 0.0, %v216
  %v218 = vpop.f32.mrb[0].mxu0
  %219 = vmatprep.mubr.bf16.mxu0 0
  %220 = vmatmul.mubr.bf16.gmra.mrb[0].mxu0 %v154
  %v221 = vpop.f32.mrb[0].mxu0
  %v222 = vadd.f32 0.0, %v221
  %v223 = vpop.f32.mrb[0].mxu0
  %v224 = vpop.f32.mrb[0].mxu0
  %v225 = vadd.f32 0.0, %v224
  %v226 = vpop.f32.mrb[0].mxu0
  %227 = vmatprep.mubr.bf16.mxu0 0
  %228 = vmatmul.mubr.bf16.gmra.mrb[0].mxu0 %v157
  %v229 = vpop.f32.mrb[0].mxu0
  %v230 = vadd.f32 0.0, %v229
  %v231 = vpop.f32.mrb[0].mxu0
  %v232 = vpop.f32.mrb[0].mxu0
  %v233 = vadd.f32 0.0, %v232
  %v234 = vpop.f32.mrb[0].mxu0
  %235 = vmatprep.mubr.bf16.mxu0 0
  %236 = vmatmul.mubr.bf16.gmra.mrb[0].mxu0 %v160
  %v237 = vpop.f32.mrb[0].mxu0
  %v238 = vadd.f32 0.0, %v237
  %v239 = vpop.f32.mrb[0].mxu0
  %v240 = vpop.f32.mrb[0].mxu0
  %v241 = vadd.f32 0.0, %v240
  %v242 = vpop.f32.mrb[0].mxu0
  %243 = vmatprep.mubr.bf16.mxu0 0
  %244 = vmatmul.mubr.bf16.gmra.mrb[0].mxu0 %v163
  %v245 = vpop.f32.mrb[0].mxu0
  %v246 = vadd.f32 0.0, %v245
  %v247 = vpop.f32.mrb[0].mxu0
  %v248 = vpop.f32.mrb[0].mxu0
  %v249 = vadd.f32 0.0, %v248
  %v250 = vpop.f32.mrb[0].mxu0
  %251 = vmatprep.mubr.bf16.mxu0 0
  %252 = vmatmul.mubr.bf16.gmra.mrb[0].mxu0 %v166
  %v253 = vpop.f32.mrb[0].mxu0
  %v254 = vadd.f32 0.0, %v253
  %v255 = vpop.f32.mrb[0].mxu0
  %v256 = vpop.f32.mrb[0].mxu0
  %v257 = vadd.f32 0.0, %v256
  %v258 = vpop.f32.mrb[0].mxu0
  %259 = vmatprep.mubr.bf16.mxu0 0
  %260 = vmatmul.mubr.bf16.gmra.mrb[0].mxu0 %v169
  %v261 = vpop.f32.mrb[0].mxu0
  %v262 = vadd.f32 0.0, %v261
  %v263 = vpop.f32.mrb[0].mxu0
  %v264 = vpop.f32.mrb[0].mxu0
  %v265 = vadd.f32 0.0, %v264
  %v266 = vpop.f32.mrb[0].mxu0
  %267 = vdwg.mxu0
  %v268 = vadd.f32 %v42, %v206
  %v269 = vadd.f32 %v43, %v209
  %v270 = vadd.f32 %v44, %v214
  %v271 = vadd.f32 %v45, %v217
  %v272 = vadd.f32 %v46, %v222
  %v273 = vadd.f32 %v47, %v225
  %v274 = vadd.f32 %v48, %v230
  %v275 = vadd.f32 %v49, %v233
  %v276 = vadd.f32 %v50, %v238
  %v277 = vadd.f32 %v51, %v241
  %v278 = vadd.f32 %v52, %v246
  %v279 = vadd.f32 %v53, %v249
  %v280 = vadd.f32 %v54, %v254
  %v281 = vadd.f32 %v55, %v257
  %v282 = vadd.f32 %v56, %v262
  %v283 = vadd.f32 %v57, %v265
  %vm284 = vcmask 64512
  %285 = vst.msk [vmem:[%s5] sm:$0xff] %vm284, %v268
  %286 = vst.msk [vmem:[%s5 + $0x8] sm:$0xff] %vm284, %v269
  %287 = vst.msk [vmem:[%s5 + $0x10] sm:$0xff] %vm284, %v270
  %288 = vst.msk [vmem:[%s5 + $0x18] sm:$0xff] %vm284, %v271
  %289 = vst.msk [vmem:[%s5 + $0x20] sm:$0xff] %vm284, %v272
  %290 = vst.msk [vmem:[%s5 + $0x28] sm:$0xff] %vm284, %v273
  %291 = vst.msk [vmem:[%s5 + $0x30] sm:$0xff] %vm284, %v274
  %292 = vst.msk [vmem:[%s5 + $0x38] sm:$0xff] %vm284, %v275
  %293 = vst.msk [vmem:[%s5 + $0x40] sm:$0xff] %vm284, %v276
  %294 = vst.msk [vmem:[%s5 + $0x48] sm:$0xff] %vm284, %v277
  %295 = vst.msk [vmem:[%s5 + $0x50] sm:$0xff] %vm284, %v278
  %296 = vst.msk [vmem:[%s5 + $0x58] sm:$0xff] %vm284, %v279
  %297 = vst.msk [vmem:[%s5 + $0x60] sm:$0xff] %vm284, %v280
  %298 = vst.msk [vmem:[%s5 + $0x68] sm:$0xff] %vm284, %v281
  %299 = vst.msk [vmem:[%s5 + $0x70] sm:$0xff] %vm284, %v282
  %300 = vst.msk [vmem:[%s5 + $0x78] sm:$0xff] %vm284, %v283
  // Predicated region
  $region26: #{residual_block_2dconv.4} parent=0 // pred_check
    %p301 = pneg %p21
  $region27: #{residual_block_2dconv.4} parent=0 // pred_check_branch
    %303 = sbr.rel (%p301) target = $region29
  $region28: #{residual_block_2dconv.4} parent=0 // pred_region
    %v304 = vld [vmem:[%s5] sm:$0xff]
    %v305 = vld [vmem:[%s5 + $0x8] sm:$0xff]
    %v306 = vld [vmem:[%s5 + $0x10] sm:$0xff]
    %v307 = vld [vmem:[%s5 + $0x18] sm:$0xff]
    %v308 = vld [vmem:[%s5 + $0x20] sm:$0xff]
    %v309 = vld [vmem:[%s5 + $0x28] sm:$0xff]
    %v310 = vld [vmem:[%s5 + $0x30] sm:$0xff]
    %v311 = vld [vmem:[%s5 + $0x38] sm:$0xff]
    %v312 = vld [vmem:[%s5 + $0x40] sm:$0xff]
    %v313 = vld [vmem:[%s5 + $0x48] sm:$0xff]
    %v314 = vld [vmem:[%s5 + $0x50] sm:$0xff]
    %v315 = vld [vmem:[%s5 + $0x58] sm:$0xff]
    %v316 = vld [vmem:[%s5 + $0x60] sm:$0xff]
    %v317 = vld [vmem:[%s5 + $0x68] sm:$0xff]
    %v318 = vld [vmem:[%s5 + $0x70] sm:$0xff]
    %v319 = vld [vmem:[%s5 + $0x78] sm:$0xff]
    %v320 = vld [vmem:[%s2] sm:$0x1]
    %v322 = vlaneseq
    %v323 = vshrl.u32 %v322, 7
    %v324 = vsub.s32 0, %v323
    %v325 = vrot.slane %v320, %v324
    %v327 = vadd.f32 %v304, %v325
    %v328 = vadd.f32 %v305, %v325
    %v329 = vadd.f32 %v306, %v325
    %v330 = vadd.f32 %v307, %v325
    %v331 = vadd.f32 %v308, %v325
    %v332 = vadd.f32 %v309, %v325
    %v333 = vadd.f32 %v310, %v325
    %v334 = vadd.f32 %v311, %v325
    %v335 = vadd.f32 %v312, %v325
    %v336 = vadd.f32 %v313, %v325
    %v337 = vadd.f32 %v314, %v325
    %v338 = vadd.f32 %v315, %v325
    %v339 = vadd.f32 %v316, %v325
    %v340 = vadd.f32 %v317, %v325
    %v341 = vadd.f32 %v318, %v325
    %v342 = vadd.f32 %v319, %v325
    %v343 = vld [vmem:[%s3] sm:$0x1]
    %v345 = vlaneseq
    %v346 = vshrl.u32 %v345, 7
    %v347 = vsub.s32 0, %v346
    %v348 = vrot.slane %v343, %v347
    %v350 = vmul.f32 %v327, %v348
    %v351 = vmul.f32 %v328, %v348
    %v352 = vmul.f32 %v329, %v348
    %v353 = vmul.f32 %v330, %v348
    %v354 = vmul.f32 %v331, %v348
    %v355 = vmul.f32 %v332, %v348
    %v356 = vmul.f32 %v333, %v348
    %v357 = vmul.f32 %v334, %v348
    %v358 = vmul.f32 %v335, %v348
    %v359 = vmul.f32 %v336, %v348
    %v360 = vmul.f32 %v337, %v348
    %v361 = vmul.f32 %v338, %v348
    %v362 = vmul.f32 %v339, %v348
    %v363 = vmul.f32 %v340, %v348
    %v364 = vmul.f32 %v341, %v348
    %v365 = vmul.f32 %v342, %v348
    %v366 = vld [vmem:[%s4] sm:$0x1]
    %v368 = vlaneseq
    %v369 = vshrl.u32 %v368, 7
    %v370 = vsub.s32 0, %v369
    %v371 = vrot.slane %v366, %v370
    %v373 = vadd.f32 %v350, %v371
    %v374 = vadd.f32 %v351, %v371
    %v375 = vadd.f32 %v352, %v371
    %v376 = vadd.f32 %v353, %v371
    %v377 = vadd.f32 %v354, %v371
    %v378 = vadd.f32 %v355, %v371
    %v379 = vadd.f32 %v356, %v371
    %v380 = vadd.f32 %v357, %v371
    %v381 = vadd.f32 %v358, %v371
    %v382 = vadd.f32 %v359, %v371
    %v383 = vadd.f32 %v360, %v371
    %v384 = vadd.f32 %v361, %v371
    %v385 = vadd.f32 %v362, %v371
    %v386 = vadd.f32 %v363, %v371
    %v387 = vadd.f32 %v364, %v371
    %v388 = vadd.f32 %v365, %v371
    %389 = vst.msk [vmem:[%s5] sm:$0xff] %vm284, %v373
    %390 = vst.msk [vmem:[%s5 + $0x8] sm:$0xff] %vm284, %v374
    %391 = vst.msk [vmem:[%s5 + $0x10] sm:$0xff] %vm284, %v375
    %392 = vst.msk [vmem:[%s5 + $0x18] sm:$0xff] %vm284, %v376
    %393 = vst.msk [vmem:[%s5 + $0x20] sm:$0xff] %vm284, %v377
    %394 = vst.msk [vmem:[%s5 + $0x28] sm:$0xff] %vm284, %v378
    %395 = vst.msk [vmem:[%s5 + $0x30] sm:$0xff] %vm284, %v379
    %396 = vst.msk [vmem:[%s5 + $0x38] sm:$0xff] %vm284, %v380
    %397 = vst.msk [vmem:[%s5 + $0x40] sm:$0xff] %vm284, %v381
    %398 = vst.msk [vmem:[%s5 + $0x48] sm:$0xff] %vm284, %v382
    %399 = vst.msk [vmem:[%s5 + $0x50] sm:$0xff] %vm284, %v383
    %400 = vst.msk [vmem:[%s5 + $0x58] sm:$0xff] %vm284, %v384
    %401 = vst.msk [vmem:[%s5 + $0x60] sm:$0xff] %vm284, %v385
    %402 = vst.msk [vmem:[%s5 + $0x68] sm:$0xff] %vm284, %v386
    %403 = vst.msk [vmem:[%s5 + $0x70] sm:$0xff] %vm284, %v387
    %404 = vst.msk [vmem:[%s5 + $0x78] sm:$0xff] %vm284, %v388
  $region29: #{residual_block_2dconv.4} parent=0 // pred_fallthru
    _
  // Predicated region
  $region30: #{residual_block_2dconv.4} parent=0 // pred_check
    _
  $region31: #{residual_block_2dconv.4} parent=0 // pred_check_branch
    %406 = sbr.rel (0) target = $region33
  $region32: #{residual_block_2dconv.4} parent=0 // pred_region
    _
  $region33: #{residual_block_2dconv.4} parent=0 // pred_fallthru
    _
  // Predicated region
  $region34: #{residual_block_2dconv.4} parent=0 // pred_check
    _
  $region35: #{residual_block_2dconv.4} parent=0 // pred_check_branch
    %408 = sbr.rel (0) target = $region37
  $region36: #{residual_block_2dconv.4} parent=0 // pred_region
    _
  $region37: #{residual_block_2dconv.4} parent=0 // pred_fallthru
    _

// kernel: residual_block_2dconv.5
$region0: #{residual_block_2dconv.5}
  #allocation0 [shape = 'u32[]', space=smem, size = 0x4, offset = 0x4, fixed_abs, tag = 'smem constant byte address 0x4 - core index']
  #allocation1 [shape = 'u32[144,128]{1,0:T(1,128)}', space=vmem, size = 0x12000, scoped, tag = 'internal scratch']
  %s0 = inlined_call_operand.vmem [shape: bf16[128,64], index: 0, kind: input, shape index: {}]
  %s1 = inlined_call_operand.vmem [shape: bf16[64,8], index: 1, kind: input, shape index: {}]
  %s2 = inlined_call_operand.vmem [shape: f32[128,8], index: 2, kind: input, shape index: {}]
  %s3 = inlined_call_operand.vmem [shape: f32[128,8], index: 3, kind: output, shape index: {}]
  %s4 = sld [smem:[#allocation0]]
  $region30: #{residual_block_2dconv.5} parent=0
    _
  %s6 = ssub.s32 1, %s4
  %s7 = scalar_select 0, %s6, %s4
  // Predicated region
  $region2: #{residual_block_2dconv.5} parent=0 // pred_check
    _
  $region3: #{residual_block_2dconv.5} parent=0 // pred_check_branch
    %9 = sbr.rel (0) target = $region5
  $region4: #{residual_block_2dconv.5} parent=0 // pred_region
    _
  $region5: #{residual_block_2dconv.5} parent=0 // pred_fallthru
    _
  // Predicated region
  $region6: #{residual_block_2dconv.5} parent=0 // pred_check
    _
  $region7: #{residual_block_2dconv.5} parent=0 // pred_check_branch
    %11 = sbr.rel (0) target = $region9
  $region8: #{residual_block_2dconv.5} parent=0 // pred_region
    _
  $region9: #{residual_block_2dconv.5} parent=0 // pred_fallthru
    _
  // Predicated region
  $region10: #{residual_block_2dconv.5} parent=0 // pred_check
    _
  $region11: #{residual_block_2dconv.5} parent=0 // pred_check_branch
    %13 = sbr.rel (0) target = $region13
  $region12: #{residual_block_2dconv.5} parent=0 // pred_region
    _
  $region13: #{residual_block_2dconv.5} parent=0 // pred_fallthru
    _
  %p15 = scmp.eq.s32.totalorder 0, 0
  // Predicated region
  $region14: #{residual_block_2dconv.5} parent=0 // pred_check
    %p16 = pneg %p15
  $region15: #{residual_block_2dconv.5} parent=0 // pred_check_branch
    %18 = sbr.rel (%p16) target = $region17
  $region16: #{residual_block_2dconv.5} parent=0 // pred_region
    %vm19 = vcmask 64512
    %20 = vst.msk [vmem:[%s3] sm:$0xff] %vm19, 0.0
    %21 = vst.msk [vmem:[%s3 + $0x8] sm:$0xff] %vm19, 0.0
    %22 = vst.msk [vmem:[%s3 + $0x10] sm:$0xff] %vm19, 0.0
    %23 = vst.msk [vmem:[%s3 + $0x18] sm:$0xff] %vm19, 0.0
    %24 = vst.msk [vmem:[%s3 + $0x20] sm:$0xff] %vm19, 0.0
    %25 = vst.msk [vmem:[%s3 + $0x28] sm:$0xff] %vm19, 0.0
    %26 = vst.msk [vmem:[%s3 + $0x30] sm:$0xff] %vm19, 0.0
    %27 = vst.msk [vmem:[%s3 + $0x38] sm:$0xff] %vm19, 0.0
    %28 = vst.msk [vmem:[%s3 + $0x40] sm:$0xff] %vm19, 0.0
    %29 = vst.msk [vmem:[%s3 + $0x48] sm:$0xff] %vm19, 0.0
    %30 = vst.msk [vmem:[%s3 + $0x50] sm:$0xff] %vm19, 0.0
    %31 = vst.msk [vmem:[%s3 + $0x58] sm:$0xff] %vm19, 0.0
    %32 = vst.msk [vmem:[%s3 + $0x60] sm:$0xff] %vm19, 0.0
    %33 = vst.msk [vmem:[%s3 + $0x68] sm:$0xff] %vm19, 0.0
    %34 = vst.msk [vmem:[%s3 + $0x70] sm:$0xff] %vm19, 0.0
    %35 = vst.msk [vmem:[%s3 + $0x78] sm:$0xff] %vm19, 0.0
  $region17: #{residual_block_2dconv.5} parent=0 // pred_fallthru
    _
  %v36 = vld [vmem:[%s3] sm:$0xff]
  %v37 = vld [vmem:[%s3 + $0x8] sm:$0xff]
  %v38 = vld [vmem:[%s3 + $0x10] sm:$0xff]
  %v39 = vld [vmem:[%s3 + $0x18] sm:$0xff]
  %v40 = vld [vmem:[%s3 + $0x20] sm:$0xff]
  %v41 = vld [vmem:[%s3 + $0x28] sm:$0xff]
  %v42 = vld [vmem:[%s3 + $0x30] sm:$0xff]
  %v43 = vld [vmem:[%s3 + $0x38] sm:$0xff]
  %v44 = vld [vmem:[%s3 + $0x40] sm:$0xff]
  %v45 = vld [vmem:[%s3 + $0x48] sm:$0xff]
  %v46 = vld [vmem:[%s3 + $0x50] sm:$0xff]
  %v47 = vld [vmem:[%s3 + $0x58] sm:$0xff]
  %v48 = vld [vmem:[%s3 + $0x60] sm:$0xff]
  %v49 = vld [vmem:[%s3 + $0x68] sm:$0xff]
  %v50 = vld [vmem:[%s3 + $0x70] sm:$0xff]
  %v51 = vld [vmem:[%s3 + $0x78] sm:$0xff]
  %v52 = vld [vmem:[%s0] sm:$0xf]
  %v53 = vld [vmem:[%s0 + $0x4] sm:$0xf]
  %v54 = vld [vmem:[%s0 + $0x8] sm:$0xf]
  %v55 = vld [vmem:[%s0 + $0xc] sm:$0xf]
  %v56 = vld [vmem:[%s0 + $0x10] sm:$0xf]
  %v57 = vld [vmem:[%s0 + $0x14] sm:$0xf]
  %v58 = vld [vmem:[%s0 + $0x18] sm:$0xf]
  %v59 = vld [vmem:[%s0 + $0x1c] sm:$0xf]
  %v60 = vld [vmem:[%s0 + $0x20] sm:$0xf]
  %v61 = vld [vmem:[%s0 + $0x24] sm:$0xf]
  %v62 = vld [vmem:[%s0 + $0x28] sm:$0xf]
  %v63 = vld [vmem:[%s0 + $0x2c] sm:$0xf]
  %v64 = vld [vmem:[%s0 + $0x30] sm:$0xf]
  %v65 = vld [vmem:[%s0 + $0x34] sm:$0xf]
  %v66 = vld [vmem:[%s0 + $0x38] sm:$0xf]
  %v67 = vld [vmem:[%s0 + $0x3c] sm:$0xf]
  %v68 = vld [vmem:[%s1] sm:$0xf]
  %v69 = vld [vmem:[%s1 + $0x4] sm:$0xf]
  %v70 = vld [vmem:[%s1 + $0x8] sm:$0xf]
  %v71 = vld [vmem:[%s1 + $0xc] sm:$0xf]
  %v72 = vld [vmem:[%s1 + $0x10] sm:$0xf]
  %v73 = vld [vmem:[%s1 + $0x14] sm:$0xf]
  %v74 = vld [vmem:[%s1 + $0x18] sm:$0xf]
  %v75 = vld [vmem:[%s1 + $0x1c] sm:$0xf]
  %v92 = vunpack.c.l.b16 %v52
  %v93 = vunpack.c.l.b16 %v53
  %v94 = vunpack.c.l.b16 %v54
  %v95 = vunpack.c.l.b16 %v55
  %v96 = vunpack.c.l.b16 %v56
  %v97 = vunpack.c.l.b16 %v57
  %v98 = vunpack.c.l.b16 %v58
  %v99 = vunpack.c.l.b16 %v59
  %v100 = vunpack.c.l.b16 %v60
  %v101 = vunpack.c.l.b16 %v61
  %v102 = vunpack.c.l.b16 %v62
  %v103 = vunpack.c.l.b16 %v63
  %v104 = vunpack.c.l.b16 %v64
  %v105 = vunpack.c.l.b16 %v65
  %v106 = vunpack.c.l.b16 %v66
  %v107 = vunpack.c.l.b16 %v67
  %v108 = vpack.c.b16 %v93, %v92
  %v109 = vpack.c.b16 %v95, %v94
  %v110 = vpack.c.b16 %v97, %v96
  %v111 = vpack.c.b16 %v99, %v98
  %v112 = vpack.c.b16 %v101, %v100
  %v113 = vpack.c.b16 %v103, %v102
  %v114 = vpack.c.b16 %v105, %v104
  %v115 = vpack.c.b16 %v107, %v106
  %v124 = vunpack.c.l.b16 %v68
  %v125 = vunpack.c.l.b16 %v69
  %v126 = vunpack.c.l.b16 %v70
  %v127 = vunpack.c.l.b16 %v71
  %v128 = vunpack.c.l.b16 %v72
  %v129 = vunpack.c.l.b16 %v73
  %v130 = vunpack.c.l.b16 %v74
  %v131 = vunpack.c.l.b16 %v75
  %v132 = vpack.c.b16 %v125, %v124
  %v133 = vpack.c.b16 %v127, %v126
  %v134 = vpack.c.b16 %v129, %v128
  %v135 = vpack.c.b16 %v131, %v130
  %vm140 = vcmask 523264
  %v142 = vsel %vm140, %v108, 0
  %v145 = vsel %vm140, %v109, 0
  %v148 = vsel %vm140, %v110, 0
  %v151 = vsel %vm140, %v111, 0
  %v154 = vsel %vm140, %v112, 0
  %v157 = vsel %vm140, %v113, 0
  %v160 = vsel %vm140, %v114, 0
  %v163 = vsel %vm140, %v115, 0
  %165 = vmatprep.subr.bf16.mxu0 0
  %166 = vmatpush1.bf16.msra.mxu0 %v132
  %167 = vmatprep.subr.bf16.mxu0 0
  %168 = vmatpush1.bf16.msra.mxu0 %v133
  %169 = vmatprep.subr.bf16.mxu0 0
  %170 = vmatpush1.bf16.msra.mxu0 %v134
  %171 = vmatprep.subr.bf16.mxu0 0
  %172 = vmatpush1.bf16.msra.mxu0 %v135
  %173 = vmatprep.subr.bf16.mxu0 0
  %174 = vmatpush1.bf16.msra.mxu0 0
  %175 = vmatprep.subr.bf16.mxu0 0
  %176 = vmatpush1.bf16.msra.mxu0 0
  %177 = vmatprep.subr.bf16.mxu0 0
  %178 = vmatpush1.bf16.msra.mxu0 0
  %179 = vmatprep.subr.bf16.mxu0 0
  %180 = vmatpush1.bf16.msra.mxu0 0
  %181 = vmatprep.subr.bf16.mxu0 0
  %182 = vmatpush1.bf16.msra.mxu0 0
  %183 = vmatprep.subr.bf16.mxu0 0
  %184 = vmatpush1.bf16.msra.mxu0 0
  %185 = vmatprep.subr.bf16.mxu0 0
  %186 = vmatpush1.bf16.msra.mxu0 0
  %187 = vmatprep.subr.bf16.mxu0 0
  %188 = vmatpush1.bf16.msra.mxu0 0
  %189 = vmatprep.subr.bf16.mxu0 0
  %190 = vmatpush1.bf16.msra.mxu0 0
  %191 = vmatprep.subr.bf16.mxu0 0
  %192 = vmatpush1.bf16.msra.mxu0 0
  %193 = vmatprep.subr.bf16.mxu0 0
  %194 = vmatpush1.bf16.msra.mxu0 0
  %195 = vmatprep.subr.bf16.mxu0 0
  %196 = vmatpush1.bf16.msra.mxu0 0
  %197 = vmatprep.mubr.bf16.mxu0 0
  %198 = vmatmul.mubr.bf16.gmra.mrb[0].mxu0 %v142
  %v199 = vpop.f32.mrb[0].mxu0
  %v200 = vadd.f32 0.0, %v199
  %v201 = vpop.f32.mrb[0].mxu0
  %v202 = vpop.f32.mrb[0].mxu0
  %v203 = vadd.f32 0.0, %v202
  %v204 = vpop.f32.mrb[0].mxu0
  %205 = vmatprep.mubr.bf16.mxu0 0
  %206 = vmatmul.mubr.bf16.gmra.mrb[0].mxu0 %v145
  %v207 = vpop.f32.mrb[0].mxu0
  %v208 = vadd.f32 0.0, %v207
  %v209 = vpop.f32.mrb[0].mxu0
  %v210 = vpop.f32.mrb[0].mxu0
  %v211 = vadd.f32 0.0, %v210
  %v212 = vpop.f32.mrb[0].mxu0
  %213 = vmatprep.mubr.bf16.mxu0 0
  %214 = vmatmul.mubr.bf16.gmra.mrb[0].mxu0 %v148
  %v215 = vpop.f32.mrb[0].mxu0
  %v216 = vadd.f32 0.0, %v215
  %v217 = vpop.f32.mrb[0].mxu0
  %v218 = vpop.f32.mrb[0].mxu0
  %v219 = vadd.f32 0.0, %v218
  %v220 = vpop.f32.mrb[0].mxu0
  %221 = vmatprep.mubr.bf16.mxu0 0
  %222 = vmatmul.mubr.bf16.gmra.mrb[0].mxu0 %v151
  %v223 = vpop.f32.mrb[0].mxu0
  %v224 = vadd.f32 0.0, %v223
  %v225 = vpop.f32.mrb[0].mxu0
  %v226 = vpop.f32.mrb[0].mxu0
  %v227 = vadd.f32 0.0, %v226
  %v228 = vpop.f32.mrb[0].mxu0
  %229 = vmatprep.mubr.bf16.mxu0 0
  %230 = vmatmul.mubr.bf16.gmra.mrb[0].mxu0 %v154
  %v231 = vpop.f32.mrb[0].mxu0
  %v232 = vadd.f32 0.0, %v231
  %v233 = vpop.f32.mrb[0].mxu0
  %v234 = vpop.f32.mrb[0].mxu0
  %v235 = vadd.f32 0.0, %v234
  %v236 = vpop.f32.mrb[0].mxu0
  %237 = vmatprep.mubr.bf16.mxu0 0
  %238 = vmatmul.mubr.bf16.gmra.mrb[0].mxu0 %v157
  %v239 = vpop.f32.mrb[0].mxu0
  %v240 = vadd.f32 0.0, %v239
  %v241 = vpop.f32.mrb[0].mxu0
  %v242 = vpop.f32.mrb[0].mxu0
  %v243 = vadd.f32 0.0, %v242
  %v244 = vpop.f32.mrb[0].mxu0
  %245 = vmatprep.mubr.bf16.mxu0 0
  %246 = vmatmul.mubr.bf16.gmra.mrb[0].mxu0 %v160
  %v247 = vpop.f32.mrb[0].mxu0
  %v248 = vadd.f32 0.0, %v247
  %v249 = vpop.f32.mrb[0].mxu0
  %v250 = vpop.f32.mrb[0].mxu0
  %v251 = vadd.f32 0.0, %v250
  %v252 = vpop.f32.mrb[0].mxu0
  %253 = vmatprep.mubr.bf16.mxu0 0
  %254 = vmatmul.mubr.bf16.gmra.mrb[0].mxu0 %v163
  %v255 = vpop.f32.mrb[0].mxu0
  %v256 = vadd.f32 0.0, %v255
  %v257 = vpop.f32.mrb[0].mxu0
  %v258 = vpop.f32.mrb[0].mxu0
  %v259 = vadd.f32 0.0, %v258
  %v260 = vpop.f32.mrb[0].mxu0
  %261 = vdwg.mxu0
  %v262 = vadd.f32 %v36, %v200
  %v263 = vadd.f32 %v37, %v203
  %v264 = vadd.f32 %v38, %v208
  %v265 = vadd.f32 %v39, %v211
  %v266 = vadd.f32 %v40, %v216
  %v267 = vadd.f32 %v41, %v219
  %v268 = vadd.f32 %v42, %v224
  %v269 = vadd.f32 %v43, %v227
  %v270 = vadd.f32 %v44, %v232
  %v271 = vadd.f32 %v45, %v235
  %v272 = vadd.f32 %v46, %v240
  %v273 = vadd.f32 %v47, %v243
  %v274 = vadd.f32 %v48, %v248
  %v275 = vadd.f32 %v49, %v251
  %v276 = vadd.f32 %v50, %v256
  %v277 = vadd.f32 %v51, %v259
  %vm278 = vcmask 64512
  %279 = vst.msk [vmem:[%s3] sm:$0xff] %vm278, %v262
  %280 = vst.msk [vmem:[%s3 + $0x8] sm:$0xff] %vm278, %v263
  %281 = vst.msk [vmem:[%s3 + $0x10] sm:$0xff] %vm278, %v264
  %282 = vst.msk [vmem:[%s3 + $0x18] sm:$0xff] %vm278, %v265
  %283 = vst.msk [vmem:[%s3 + $0x20] sm:$0xff] %vm278, %v266
  %284 = vst.msk [vmem:[%s3 + $0x28] sm:$0xff] %vm278, %v267
  %285 = vst.msk [vmem:[%s3 + $0x30] sm:$0xff] %vm278, %v268
  %286 = vst.msk [vmem:[%s3 + $0x38] sm:$0xff] %vm278, %v269
  %287 = vst.msk [vmem:[%s3 + $0x40] sm:$0xff] %vm278, %v270
  %288 = vst.msk [vmem:[%s3 + $0x48] sm:$0xff] %vm278, %v271
  %289 = vst.msk [vmem:[%s3 + $0x50] sm:$0xff] %vm278, %v272
  %290 = vst.msk [vmem:[%s3 + $0x58] sm:$0xff] %vm278, %v273
  %291 = vst.msk [vmem:[%s3 + $0x60] sm:$0xff] %vm278, %v274
  %292 = vst.msk [vmem:[%s3 + $0x68] sm:$0xff] %vm278, %v275
  %293 = vst.msk [vmem:[%s3 + $0x70] sm:$0xff] %vm278, %v276
  %294 = vst.msk [vmem:[%s3 + $0x78] sm:$0xff] %vm278, %v277
  // Predicated region
  $region18: #{residual_block_2dconv.5} parent=0 // pred_check
    %p295 = pneg %p15
  $region19: #{residual_block_2dconv.5} parent=0 // pred_check_branch
    %297 = sbr.rel (%p295) target = $region21
  $region20: #{residual_block_2dconv.5} parent=0 // pred_region
    %v298 = vld [vmem:[%s2] sm:$0xff]
    %v299 = vld [vmem:[%s2 + $0x8] sm:$0xff]
    %v300 = vld [vmem:[%s2 + $0x10] sm:$0xff]
    %v301 = vld [vmem:[%s2 + $0x18] sm:$0xff]
    %v302 = vld [vmem:[%s2 + $0x20] sm:$0xff]
    %v303 = vld [vmem:[%s2 + $0x28] sm:$0xff]
    %v304 = vld [vmem:[%s2 + $0x30] sm:$0xff]
    %v305 = vld [vmem:[%s2 + $0x38] sm:$0xff]
    %v306 = vld [vmem:[%s2 + $0x40] sm:$0xff]
    %v307 = vld [vmem:[%s2 + $0x48] sm:$0xff]
    %v308 = vld [vmem:[%s2 + $0x50] sm:$0xff]
    %v309 = vld [vmem:[%s2 + $0x58] sm:$0xff]
    %v310 = vld [vmem:[%s2 + $0x60] sm:$0xff]
    %v311 = vld [vmem:[%s2 + $0x68] sm:$0xff]
    %v312 = vld [vmem:[%s2 + $0x70] sm:$0xff]
    %v313 = vld [vmem:[%s2 + $0x78] sm:$0xff]
    %v314 = vmul.f32 %v298, 2.0
    %v315 = vmul.f32 %v299, 2.0
    %v316 = vmul.f32 %v300, 2.0
    %v317 = vmul.f32 %v301, 2.0
    %v318 = vmul.f32 %v302, 2.0
    %v319 = vmul.f32 %v303, 2.0
    %v320 = vmul.f32 %v304, 2.0
    %v321 = vmul.f32 %v305, 2.0
    %v322 = vmul.f32 %v306, 2.0
    %v323 = vmul.f32 %v307, 2.0
    %v324 = vmul.f32 %v308, 2.0
    %v325 = vmul.f32 %v309, 2.0
    %v326 = vmul.f32 %v310, 2.0
    %v327 = vmul.f32 %v311, 2.0
    %v328 = vmul.f32 %v312, 2.0
    %v329 = vmul.f32 %v313, 2.0
    %v330 = vld [vmem:[%s3] sm:$0xff]
    %v331 = vld [vmem:[%s3 + $0x8] sm:$0xff]
    %v332 = vld [vmem:[%s3 + $0x10] sm:$0xff]
    %v333 = vld [vmem:[%s3 + $0x18] sm:$0xff]
    %v334 = vld [vmem:[%s3 + $0x20] sm:$0xff]
    %v335 = vld [vmem:[%s3 + $0x28] sm:$0xff]
    %v336 = vld [vmem:[%s3 + $0x30] sm:$0xff]
    %v337 = vld [vmem:[%s3 + $0x38] sm:$0xff]
    %v338 = vld [vmem:[%s3 + $0x40] sm:$0xff]
    %v339 = vld [vmem:[%s3 + $0x48] sm:$0xff]
    %v340 = vld [vmem:[%s3 + $0x50] sm:$0xff]
    %v341 = vld [vmem:[%s3 + $0x58] sm:$0xff]
    %v342 = vld [vmem:[%s3 + $0x60] sm:$0xff]
    %v343 = vld [vmem:[%s3 + $0x68] sm:$0xff]
    %v344 = vld [vmem:[%s3 + $0x70] sm:$0xff]
    %v345 = vld [vmem:[%s3 + $0x78] sm:$0xff]
    %v346 = vmul.f32 %v330, 0.3
    %v347 = vmul.f32 %v331, 0.3
    %v348 = vmul.f32 %v332, 0.3
    %v349 = vmul.f32 %v333, 0.3
    %v350 = vmul.f32 %v334, 0.3
    %v351 = vmul.f32 %v335, 0.3
    %v352 = vmul.f32 %v336, 0.3
    %v353 = vmul.f32 %v337, 0.3
    %v354 = vmul.f32 %v338, 0.3
    %v355 = vmul.f32 %v339, 0.3
    %v356 = vmul.f32 %v340, 0.3
    %v357 = vmul.f32 %v341, 0.3
    %v358 = vmul.f32 %v342, 0.3
    %v359 = vmul.f32 %v343, 0.3
    %v360 = vmul.f32 %v344, 0.3
    %v361 = vmul.f32 %v345, 0.3
    %v362 = vadd.f32 %v314, %v346
    %v363 = vadd.f32 %v315, %v347
    %v364 = vadd.f32 %v316, %v348
    %v365 = vadd.f32 %v317, %v349
    %v366 = vadd.f32 %v318, %v350
    %v367 = vadd.f32 %v319, %v351
    %v368 = vadd.f32 %v320, %v352
    %v369 = vadd.f32 %v321, %v353
    %v370 = vadd.f32 %v322, %v354
    %v371 = vadd.f32 %v323, %v355
    %v372 = vadd.f32 %v324, %v356
    %v373 = vadd.f32 %v325, %v357
    %v374 = vadd.f32 %v326, %v358
    %v375 = vadd.f32 %v327, %v359
    %v376 = vadd.f32 %v328, %v360
    %v377 = vadd.f32 %v329, %v361
    %378 = vst.msk [vmem:[%s3] sm:$0xff] %vm278, %v362
    %379 = vst.msk [vmem:[%s3 + $0x8] sm:$0xff] %vm278, %v363
    %380 = vst.msk [vmem:[%s3 + $0x10] sm:$0xff] %vm278, %v364
    %381 = vst.msk [vmem:[%s3 + $0x18] sm:$0xff] %vm278, %v365
    %382 = vst.msk [vmem:[%s3 + $0x20] sm:$0xff] %vm278, %v366
    %383 = vst.msk [vmem:[%s3 + $0x28] sm:$0xff] %vm278, %v367
    %384 = vst.msk [vmem:[%s3 + $0x30] sm:$0xff] %vm278, %v368
    %385 = vst.msk [vmem:[%s3 + $0x38] sm:$0xff] %vm278, %v369
    %386 = vst.msk [vmem:[%s3 + $0x40] sm:$0xff] %vm278, %v370
    %387 = vst.msk [vmem:[%s3 + $0x48] sm:$0xff] %vm278, %v371
    %388 = vst.msk [vmem:[%s3 + $0x50] sm:$0xff] %vm278, %v372
    %389 = vst.msk [vmem:[%s3 + $0x58] sm:$0xff] %vm278, %v373
    %390 = vst.msk [vmem:[%s3 + $0x60] sm:$0xff] %vm278, %v374
    %391 = vst.msk [vmem:[%s3 + $0x68] sm:$0xff] %vm278, %v375
    %392 = vst.msk [vmem:[%s3 + $0x70] sm:$0xff] %vm278, %v376
    %393 = vst.msk [vmem:[%s3 + $0x78] sm:$0xff] %vm278, %v377
  $region21: #{residual_block_2dconv.5} parent=0 // pred_fallthru
    _
  // Predicated region
  $region22: #{residual_block_2dconv.5} parent=0 // pred_check
    _
  $region23: #{residual_block_2dconv.5} parent=0 // pred_check_branch
    %395 = sbr.rel (0) target = $region25
  $region24: #{residual_block_2dconv.5} parent=0 // pred_region
    _
  $region25: #{residual_block_2dconv.5} parent=0 // pred_fallthru
    _
  // Predicated region
  $region26: #{residual_block_2dconv.5} parent=0 // pred_check
    _
  $region27: #{residual_block_2dconv.5} parent=0 // pred_check_branch
    %397 = sbr.rel (0) target = $region29
  $region28: #{residual_block_2dconv.5} parent=0 // pred_region
    _
  $region29: #{residual_block_2dconv.5} parent=0 // pred_fallthru
    _

</llo_original>
